<compile_context>
chip_gen: v7x
topology: tpu7x:2x2x1
jax: 0.10.0
libtpu: 0.0.40
codegen_flags: <defaults>
</compile_context>

<pallas_src>
import jax
import jax.numpy as jnp
from jax.experimental import pallas as pl
from jax.experimental.pallas import tpu as pltpu


# --------------------------------------------------------------------------- #
# Kernel
# --------------------------------------------------------------------------- #
def _make_kernel(n_layers):
    L = n_layers

    def kernel(h_ref, a_ref, m_ref, w_ref, f_ref, y_ref):
        # h_ref : (N, H)        node features, zero-padded to H lanes, mxu dtype
        # a_ref : (N, N)        dense adjacency A[dst, src] in {0,1}, mxu dtype
        # m_ref : (B, N)        graph-membership pooling matrix, mxu dtype
        # w_ref : (2+2L, H, H)  [wembT_pad, (W_selfT, W_neighT) x L, pT_pad], mxu dtype
        # f_ref : (L+3, H)      [b_emb, b_layer_0..L-1, ||p||^2_pad, w_fc_pad], f32
        # y_ref : (B, 128)      lane-dense sigmoid output
        f32 = jnp.float32
        mxu = a_ref.dtype

        # ---- hoisted aggregator / pooling normalisation (done once) --------
        A = a_ref[...].astype(f32)
        deg = jnp.sum(A, axis=1, keepdims=True)
        # DGL mean aggregator: zero-in-degree nodes receive 0
        deg_inv = jnp.where(deg > 0, 1.0 / jnp.maximum(deg, 1.0), 0.0)
        a_norm = (A * deg_inv).astype(mxu)                 # row-normalised A

        M = m_ref[...].astype(f32)
        cnt = jnp.sum(M, axis=1, keepdims=True)
        m_norm = (M / jnp.maximum(cnt, 1.0)).astype(mxu)   # dgl.mean_nodes weights

        fv = f_ref[...]                                    # (L+3, H) f32 constants

        # ---- embedding_h: h = h @ W_emb^T + b -------------------------------
        h = jnp.dot(h_ref[...], w_ref[0], preferred_element_type=f32) + fv[0:1, :]

        # ---- GraphSage encoder stack (mean aggregator) ----------------------
        # dropout(p=0) = identity, batch_norm disabled, residual enabled.
        for l in range(L):
            h_in = h
            hb = h.astype(mxu)
            neigh = jnp.dot(a_norm, hb, preferred_element_type=f32)        # (N, H)
            # Linear([h, neigh]) without the lane-concat: two K=H MXU pushes
            bundle = (jnp.dot(hb, w_ref[1 + 2 * l], preferred_element_type=f32)
                      + jnp.dot(neigh.astype(mxu), w_ref[2 + 2 * l],
                                preferred_element_type=f32)
                      + fv[1 + l:2 + l, :])
            # F.normalize(bundle, p=2, dim=1), torch eps=1e-12 -> rsqrt on EUP
            sumsq = jnp.sum(bundle * bundle, axis=1, keepdims=True)
            bundle = bundle * jax.lax.rsqrt(jnp.maximum(sumsq, 1e-24))
            h = h_in + jnp.maximum(bundle, 0.0)            # ReLU + residual

        # ---- dgl.mean_nodes(g, 'h') -----------------------------------------
        hg = jnp.dot(m_norm, h.astype(mxu), preferred_element_type=f32)    # (B, H)

        # ---- prototype similarities (pos & neg fused; padded columns inert) --
        pnorm2 = fv[L + 1:L + 2, :]                        # (1, H), 0 on pad cols
        wfc = fv[L + 2:L + 3, :]                           # (1, H), 0 on pad cols
        hg2 = jnp.sum(hg * hg, axis=1, keepdims=True)      # (B, 1)
        sims = jnp.dot(hg.astype(mxu), w_ref[1 + 2 * L], preferred_element_type=f32)
        # ||hg - p||^2 via expansion; clamp >=0 guards fp cancellation (the
        # torch reference's norm^2 is non-negative by construction).
        d = jnp.maximum(hg2 + pnorm2 - 2.0 * sims, 0.0)
        s = jnp.log((d + 1.0) / (d + 1e-12))               # module uses eps=1e-12

        # ---- FC (n_classes=1, no bias) + sigmoid: VPU multiply + lane reduce -
        y = jnp.sum(s * wfc, axis=1, keepdims=True)        # (B, 1)
        y_ref[...] = jnp.broadcast_to(jax.nn.sigmoid(y), y_ref.shape)

    return kernel


# --------------------------------------------------------------------------- #
# Wrapper: parameter packing + pallas_call
# --------------------------------------------------------------------------- #
def protgnn_forward(h_nodes, adj, membership, params, *, mxu_dtype=jnp.bfloat16):
    """Fused ProtGNNNet forward.

    h_nodes    : (G, N, in_dim) f32    node features per graph-batch block
    adj        : (G, N, N)      {0,1}  dense adjacency, A[dst, src] = 1
    membership : (G, B, N)      {0,1}  graph-membership pooling matrix
    returns    : (G*B,) f32            sigmoid(logit) per graph
    """
    G, N, in_dim = h_nodes.shape
    Bg = membership.shape[1]
    hidden = params["w_emb"].shape[0]
    L = len(params["w_layers"])
    P = params["p_pos"].shape[0]
    n_classes = params["w_fc"].shape[0]
    assert n_classes == 1            # FC done as a VPU lane reduce
    assert in_dim <= hidden and 2 * P <= hidden
    assert Bg % 8 == 0               # sublane-full output store
    LANE = 128
    f32 = jnp.float32

    # ---- MXU weight slab: (2 + 2L, H, H), every section H-row aligned -------
    wembT_pad = jnp.zeros((hidden, hidden), f32).at[:in_dim, :].set(params["w_emb"].T)
    mats = [wembT_pad]
    for w in params["w_layers"]:                      # w: (H, 2H)
        mats.append(w[:, :hidden].T)                  # W_selfT  (H, H)
        mats.append(w[:, hidden:].T)                  # W_neighT (H, H)
    pT = jnp.concatenate([params["p_pos"].T, params["p_neg"].T], axis=1)     # (H, 2P)
    pT_pad = jnp.zeros((hidden, hidden), f32).at[:, :2 * P].set(pT)
    mats.append(pT_pad)
    w_slab = jnp.stack(mats).astype(mxu_dtype)        # (2+2L, H, H)

    # ---- small f32 constant slab: (L + 3, H) ---------------------------------
    # ||p||^2 computed from the (possibly bf16-rounded) prototypes actually
    # used in the matmul, so the expanded distance stays self-consistent.
    pT_used = pT_pad.astype(mxu_dtype).astype(f32)
    pnorm2 = jnp.sum(jnp.square(pT_used), axis=0)                             # (H,)
    wfc_pad = jnp.zeros((hidden,), f32).at[:2 * P].set(params["w_fc"][0])
    f_slab = jnp.stack([params["b_emb"], *params["b_layers"], pnorm2, wfc_pad])

    # ---- per-block data, features zero-padded to H lanes --------------------
    h_pad = jnp.zeros((G, N, hidden), f32).at[:, :, :in_dim].set(h_nodes)
    h_pad = h_pad.astype(mxu_dtype)
    adj_c = adj.astype(mxu_dtype)                     # 0/1 exact in bf16
    mem_c = membership.astype(mxu_dtype)

    grid_spec = pltpu.PrefetchScalarGridSpec(
        num_scalar_prefetch=0,
        grid=(G,),
        in_specs=[
            pl.BlockSpec((None, N, hidden), lambda g: (g, 0, 0)),
            pl.BlockSpec((None, N, N), lambda g: (g, 0, 0)),
            pl.BlockSpec((None, Bg, N), lambda g: (g, 0, 0)),
            pl.BlockSpec(w_slab.shape, lambda g: (0, 0, 0)),   # grid-resident
            pl.BlockSpec(f_slab.shape, lambda g: (0, 0)),      # grid-resident
        ],
        out_specs=pl.BlockSpec((None, Bg, LANE), lambda g: (g, 0, 0)),
    )

    y = pl.pallas_call(
        _make_kernel(L),
        out_shape=jax.ShapeDtypeStruct((G, Bg, LANE), f32),
        grid_spec=grid_spec,
        compiler_params=pltpu.CompilerParams(
            dimension_semantics=("parallel",)),        # both TCs on v7x
    )(h_pad, adj_c, mem_c, w_slab, f_slab)

    # torch.sigmoid(y).squeeze() with n_classes == 1, flattened over all graphs
    return y[:, :, 0].reshape(G * Bg)


# --------------------------------------------------------------------------- #
# Pure-JAX reference (exact f32 semantics of the PyTorch module)
# --------------------------------------------------------------------------- #
def protgnn_reference(h_nodes, adj, membership, params):
    h = jnp.einsum('gnf,hf->gnh', h_nodes, params["w_emb"]) + params["b_emb"]
    deg = jnp.sum(adj, axis=2, keepdims=True)
    deg_inv = jnp.where(deg > 0, 1.0 / jnp.maximum(deg, 1.0), 0.0)
    for l in range(len(params["w_layers"])):
        h_in = h
        neigh = jnp.einsum('gij,gjh->gih', adj, h) * deg_inv
        bundle = (jnp.einsum('gnk,hk->gnh',
                             jnp.concatenate([h, neigh], axis=-1),
                             params["w_layers"][l])
                  + params["b_layers"][l])
        norm = jnp.sqrt(jnp.sum(bundle * bundle, axis=-1, keepdims=True))
        bundle = bundle / jnp.maximum(norm, 1e-12)
        h = h_in + jnp.maximum(bundle, 0.0)
    cnt = jnp.sum(membership, axis=2, keepdims=True)
    hg = jnp.einsum('gbn,gnh->gbh', membership, h) / cnt
    protos = jnp.concatenate([params["p_pos"], params["p_neg"]], axis=0)      # (2P, H)
    d = jnp.sum((hg[:, :, None, :] - protos[None, None, :, :]) ** 2, axis=-1)  # (G,B,2P)
    s = jnp.log((d + 1.0) / (d + 1e-12))
    y = jnp.einsum('gbp,cp->gbc', s, params["w_fc"])[..., 0]
    return jax.nn.sigmoid(y).reshape(-1)


# --------------------------------------------------------------------------- #
if __name__ == "__main__":
    key = jax.random.PRNGKey(0)
    ks = jax.random.split(key, 8)

    # net_params
    in_dim, hidden, P, n_classes, L = 8, 32, 3, 1, 2
    incorrect_strength = -0.5

    # Graph batching: num_blocks independent graph-batches (the "parallel"
    # grid axis), each holding graphs_per_block graphs of nodes_per_graph
    # nodes as a block-diagonal dense adjacency.
    num_blocks = 2
    graphs_per_block = 8          # multiple of 8 -> unmasked output store
    nodes_per_graph = 8
    N = graphs_per_block * nodes_per_graph           # 64 nodes per block
    total_graphs = num_blocks * graphs_per_block

    h_nodes = jax.random.normal(ks[0], (num_blocks, N, in_dim), jnp.float32)

    # Per-graph adjacency: directed ring + random extra edges (in-degree >= 1).
    idx = jnp.arange(nodes_per_graph)
    ring = jnp.zeros((nodes_per_graph, nodes_per_graph), jnp.float32)
    ring = ring.at[(idx + 1) % nodes_per_graph, idx].set(1.0)       # src -> src+1
    extra = jax.random.bernoulli(
        ks[1], 0.3,
        (num_blocks, graphs_per_block, nodes_per_graph, nodes_per_graph)
    ).astype(jnp.float32)
    eye = jnp.eye(nodes_per_graph, dtype=jnp.float32)
    graph_adj = jnp.clip(ring[None, None] + extra * (1.0 - eye)[None, None], 0.0, 1.0)

    adj = jnp.zeros((num_blocks, N, N), jnp.float32)
    membership = jnp.zeros((num_blocks, graphs_per_block, N), jnp.float32)
    for b in range(graphs_per_block):
        s = b * nodes_per_graph
        adj = adj.at[:, s:s + nodes_per_graph, s:s + nodes_per_graph].set(graph_adj[:, b])
        membership = membership.at[:, b, s:s + nodes_per_graph].set(1.0)

    # Deterministic parameters (shapes per the module's __init__)
    params = {
        "w_emb": jax.random.uniform(ks[2], (hidden, in_dim), jnp.float32, -0.3, 0.3),
        "b_emb": jax.random.uniform(ks[3], (hidden,), jnp.float32, -0.1, 0.1),
        # GraphSageLayer NodeApply: Linear(2*hidden, hidden) per layer
        "w_layers": [jax.random.uniform(jax.random.fold_in(ks[4], l),
                                        (hidden, 2 * hidden), jnp.float32, -0.2, 0.2)
                     for l in range(L)],
        "b_layers": [jax.random.uniform(jax.random.fold_in(ks[5], l),
                                        (hidden,), jnp.float32, -0.1, 0.1)
                     for l in range(L)],
        # torch.rand -> U[0, 1)
        "p_pos": jax.random.uniform(ks[6], (P, hidden), jnp.float32),
        "p_neg": jax.random.uniform(ks[7], (P, hidden), jnp.float32),
        # FC weight after set_last_layer_incorrect_connection:
        # 1.0 for positive-prototype columns, incorrect_strength elsewhere.
        "w_fc": jnp.concatenate(
            [jnp.ones((n_classes, P), jnp.float32),
             jnp.full((n_classes, P), incorrect_strength, jnp.float32)], axis=1),
    }

    y_ref = protgnn_reference(h_nodes, adj, membership, params)

    # Exact path (f32 MXU operands): tight check against the pure-JAX reference.
    y32 = jax.block_until_ready(
        protgnn_forward(h_nodes, adj, membership, params, mxu_dtype=jnp.float32))
    assert y32.shape == (total_graphs,)
    assert bool(jnp.all(jnp.isfinite(y32)))
    assert bool(jnp.max(jnp.abs(y32 - y_ref)) < 2e-3)

    # Mixed-precision path (bf16 MXU operands, f32 accumulate / elementwise):
    # the perf-default for v6e/v7x at scale.
    ybf = jax.block_until_ready(
        protgnn_forward(h_nodes, adj, membership, params, mxu_dtype=jnp.bfloat16))
    assert ybf.shape == (total_graphs,)
    assert bool(jnp.all(jnp.isfinite(ybf)))

    print("KERNEL_OK")
</pallas_src>

<mosaic_0001>
module attributes {stable_mosaic.version = 11 : i64} {
  func.func @kernel(%arg0: i32, %arg1: memref<1x64x32xf32, #tpu.memory_space<vmem>>, %arg2: memref<1x64x64xf32, #tpu.memory_space<vmem>>, %arg3: memref<1x8x64xf32, #tpu.memory_space<vmem>>, %arg4: memref<6x32x32xf32, #tpu.memory_space<vmem>>, %arg5: memref<5x32xf32, #tpu.memory_space<vmem>>, %arg6: memref<1x8x128xf32, #tpu.memory_space<vmem>>) attributes {dimension_semantics = [#tpu.dimension_semantics<parallel>], iteration_bounds = array<i64: 2>, scalar_prefetch = 0 : i64, scratch_operands = 0 : i64, tpu.core_type = #tpu.core_type<tc>, window_params = [{transform_indices = @transform_0, window_bounds = array<i64: 1, 64, 32>}, {transform_indices = @transform_1, window_bounds = array<i64: 1, 64, 64>}, {transform_indices = @transform_2, window_bounds = array<i64: 1, 8, 64>}, {pipeline_mode = #tpu.pipeline_mode<synchronous>, transform_indices = @transform_3, window_bounds = array<i64: 6, 32, 32>}, {pipeline_mode = #tpu.pipeline_mode<synchronous>, transform_indices = @transform_4, window_bounds = array<i64: 5, 32>}, {transform_indices = @transform_5, window_bounds = array<i64: 1, 8, 128>}]} {
    %c0 = arith.constant 0 : index
    %c0_0 = arith.constant 0 : index
    %c0_1 = arith.constant 0 : index
    %0 = vector.load %arg2[%c0, %c0_0, %c0_1] : memref<1x64x64xf32, #tpu.memory_space<vmem>>, vector<1x64x64xf32>
    %1 = vector.shape_cast %0 : vector<1x64x64xf32> to vector<64x64xf32>
    %cst = arith.constant dense<0.000000e+00> : vector<64xf32>
    %2 = vector.multi_reduction <add>, %1, %cst [1] : vector<64x64xf32> to vector<64xf32>
    %3 = vector.shape_cast %2 : vector<64xf32> to vector<64x1xf32>
    %cst_2 = arith.constant 0.000000e+00 : f32
    %4 = vector.broadcast %cst_2 : f32 to vector<64x1xf32>
    %5 = arith.cmpf ogt, %3, %4 : vector<64x1xf32>
    %cst_3 = arith.constant 1.000000e+00 : f32
    %6 = vector.broadcast %cst_3 : f32 to vector<64x1xf32>
    %7 = arith.maximumf %3, %6 : vector<64x1xf32>
    %cst_4 = arith.constant 1.000000e+00 : f32
    %8 = vector.broadcast %cst_4 : f32 to vector<64x1xf32>
    %9 = arith.divf %8, %7 : vector<64x1xf32>
    %cst_5 = arith.constant 0.000000e+00 : f32
    %10 = vector.broadcast %cst_5 : f32 to vector<64x1xf32>
    %11 = arith.select %5, %9, %10 : vector<64x1xi1>, vector<64x1xf32>
    %12 = vector.broadcast %11 : vector<64x1xf32> to vector<64x64xf32>
    %13 = arith.mulf %1, %12 : vector<64x64xf32>
    %c0_6 = arith.constant 0 : index
    %c0_7 = arith.constant 0 : index
    %c0_8 = arith.constant 0 : index
    %14 = vector.load %arg3[%c0_6, %c0_7, %c0_8] : memref<1x8x64xf32, #tpu.memory_space<vmem>>, vector<1x8x64xf32>
    %15 = vector.shape_cast %14 : vector<1x8x64xf32> to vector<8x64xf32>
    %cst_9 = arith.constant dense<0.000000e+00> : vector<8xf32>
    %16 = vector.multi_reduction <add>, %15, %cst_9 [1] : vector<8x64xf32> to vector<8xf32>
    %17 = vector.shape_cast %16 : vector<8xf32> to vector<8x1xf32>
    %cst_10 = arith.constant 1.000000e+00 : f32
    %18 = vector.broadcast %cst_10 : f32 to vector<8x1xf32>
    %19 = arith.maximumf %17, %18 : vector<8x1xf32>
    %20 = vector.broadcast %19 : vector<8x1xf32> to vector<8x64xf32>
    %21 = arith.divf %15, %20 : vector<8x64xf32>
    %c0_11 = arith.constant 0 : index
    %c0_12 = arith.constant 0 : index
    %22 = vector.load %arg5[%c0_11, %c0_12] : memref<5x32xf32, #tpu.memory_space<vmem>>, vector<5x32xf32>
    %c0_13 = arith.constant 0 : index
    %c0_14 = arith.constant 0 : index
    %c0_15 = arith.constant 0 : index
    %23 = vector.load %arg1[%c0_13, %c0_14, %c0_15] : memref<1x64x32xf32, #tpu.memory_space<vmem>>, vector<1x64x32xf32>
    %24 = vector.shape_cast %23 : vector<1x64x32xf32> to vector<64x32xf32>
    %c0_16 = arith.constant 0 : index
    %c0_17 = arith.constant 0 : index
    %c0_18 = arith.constant 0 : index
    %25 = vector.load %arg4[%c0_16, %c0_17, %c0_18] : memref<6x32x32xf32, #tpu.memory_space<vmem>>, vector<1x32x32xf32>
    %26 = vector.shape_cast %25 : vector<1x32x32xf32> to vector<32x32xf32>
    %cst_19 = arith.constant dense<0.000000e+00> : vector<64x32xf32>
    %27 = tpu.matmul %24, %26, %cst_19 {dimension_numbers = #tpu.dot_dimension_numbers<[1], [0], [0], [1], [0, 0, 1, 1], [], []>} : vector<64x32xf32>, vector<32x32xf32>, vector<64x32xf32> -> vector<64x32xf32>
    %28 = vector.extract_strided_slice %22 {offsets = [0, 0], sizes = [1, 32], strides = [1, 1]} : vector<5x32xf32> to vector<1x32xf32>
    %29 = vector.broadcast %28 : vector<1x32xf32> to vector<64x32xf32>
    %30 = arith.addf %27, %29 : vector<64x32xf32>
    %cst_20 = arith.constant dense<0.000000e+00> : vector<64x32xf32>
    %31 = tpu.matmul %13, %30, %cst_20 {dimension_numbers = #tpu.dot_dimension_numbers<[1], [0], [0], [1], [0, 0, 1, 1], [], []>} : vector<64x64xf32>, vector<64x32xf32>, vector<64x32xf32> -> vector<64x32xf32>
    %c1 = arith.constant 1 : index
    %c0_21 = arith.constant 0 : index
    %c0_22 = arith.constant 0 : index
    %32 = vector.load %arg4[%c1, %c0_21, %c0_22] : memref<6x32x32xf32, #tpu.memory_space<vmem>>, vector<1x32x32xf32>
    %33 = vector.shape_cast %32 : vector<1x32x32xf32> to vector<32x32xf32>
    %cst_23 = arith.constant dense<0.000000e+00> : vector<64x32xf32>
    %34 = tpu.matmul %30, %33, %cst_23 {dimension_numbers = #tpu.dot_dimension_numbers<[1], [0], [0], [1], [0, 0, 1, 1], [], []>} : vector<64x32xf32>, vector<32x32xf32>, vector<64x32xf32> -> vector<64x32xf32>
    %c2 = arith.constant 2 : index
    %c0_24 = arith.constant 0 : index
    %c0_25 = arith.constant 0 : index
    %35 = vector.load %arg4[%c2, %c0_24, %c0_25] : memref<6x32x32xf32, #tpu.memory_space<vmem>>, vector<1x32x32xf32>
    %36 = vector.shape_cast %35 : vector<1x32x32xf32> to vector<32x32xf32>
    %cst_26 = arith.constant dense<0.000000e+00> : vector<64x32xf32>
    %37 = tpu.matmul %31, %36, %cst_26 {dimension_numbers = #tpu.dot_dimension_numbers<[1], [0], [0], [1], [0, 0, 1, 1], [], []>} : vector<64x32xf32>, vector<32x32xf32>, vector<64x32xf32> -> vector<64x32xf32>
    %38 = arith.addf %34, %37 : vector<64x32xf32>
    %39 = vector.extract_strided_slice %22 {offsets = [1, 0], sizes = [1, 32], strides = [1, 1]} : vector<5x32xf32> to vector<1x32xf32>
    %40 = vector.broadcast %39 : vector<1x32xf32> to vector<64x32xf32>
    %41 = arith.addf %38, %40 : vector<64x32xf32>
    %42 = arith.mulf %41, %41 : vector<64x32xf32>
    %cst_27 = arith.constant dense<0.000000e+00> : vector<64xf32>
    %43 = vector.multi_reduction <add>, %42, %cst_27 [1] : vector<64x32xf32> to vector<64xf32>
    %44 = vector.shape_cast %43 : vector<64xf32> to vector<64x1xf32>
    %cst_28 = arith.constant 1.000000e-24 : f32
    %45 = vector.broadcast %cst_28 : f32 to vector<64x1xf32>
    %46 = arith.maximumf %44, %45 : vector<64x1xf32>
    %47 = math.rsqrt %46 : vector<64x1xf32>
    %48 = vector.broadcast %47 : vector<64x1xf32> to vector<64x32xf32>
    %49 = arith.mulf %41, %48 : vector<64x32xf32>
    %cst_29 = arith.constant 0.000000e+00 : f32
    %50 = vector.broadcast %cst_29 : f32 to vector<64x32xf32>
    %51 = arith.maximumf %49, %50 : vector<64x32xf32>
    %52 = arith.addf %30, %51 : vector<64x32xf32>
    %cst_30 = arith.constant dense<0.000000e+00> : vector<64x32xf32>
    %53 = tpu.matmul %13, %52, %cst_30 {dimension_numbers = #tpu.dot_dimension_numbers<[1], [0], [0], [1], [0, 0, 1, 1], [], []>} : vector<64x64xf32>, vector<64x32xf32>, vector<64x32xf32> -> vector<64x32xf32>
    %c3 = arith.constant 3 : index
    %c0_31 = arith.constant 0 : index
    %c0_32 = arith.constant 0 : index
    %54 = vector.load %arg4[%c3, %c0_31, %c0_32] : memref<6x32x32xf32, #tpu.memory_space<vmem>>, vector<1x32x32xf32>
    %55 = vector.shape_cast %54 : vector<1x32x32xf32> to vector<32x32xf32>
    %cst_33 = arith.constant dense<0.000000e+00> : vector<64x32xf32>
    %56 = tpu.matmul %52, %55, %cst_33 {dimension_numbers = #tpu.dot_dimension_numbers<[1], [0], [0], [1], [0, 0, 1, 1], [], []>} : vector<64x32xf32>, vector<32x32xf32>, vector<64x32xf32> -> vector<64x32xf32>
    %c4 = arith.constant 4 : index
    %c0_34 = arith.constant 0 : index
    %c0_35 = arith.constant 0 : index
    %57 = vector.load %arg4[%c4, %c0_34, %c0_35] : memref<6x32x32xf32, #tpu.memory_space<vmem>>, vector<1x32x32xf32>
    %58 = vector.shape_cast %57 : vector<1x32x32xf32> to vector<32x32xf32>
    %cst_36 = arith.constant dense<0.000000e+00> : vector<64x32xf32>
    %59 = tpu.matmul %53, %58, %cst_36 {dimension_numbers = #tpu.dot_dimension_numbers<[1], [0], [0], [1], [0, 0, 1, 1], [], []>} : vector<64x32xf32>, vector<32x32xf32>, vector<64x32xf32> -> vector<64x32xf32>
    %60 = arith.addf %56, %59 : vector<64x32xf32>
    %61 = vector.extract_strided_slice %22 {offsets = [2, 0], sizes = [1, 32], strides = [1, 1]} : vector<5x32xf32> to vector<1x32xf32>
    %62 = vector.broadcast %61 : vector<1x32xf32> to vector<64x32xf32>
    %63 = arith.addf %60, %62 : vector<64x32xf32>
    %64 = arith.mulf %63, %63 : vector<64x32xf32>
    %cst_37 = arith.constant dense<0.000000e+00> : vector<64xf32>
    %65 = vector.multi_reduction <add>, %64, %cst_37 [1] : vector<64x32xf32> to vector<64xf32>
    %66 = vector.shape_cast %65 : vector<64xf32> to vector<64x1xf32>
    %cst_38 = arith.constant 1.000000e-24 : f32
    %67 = vector.broadcast %cst_38 : f32 to vector<64x1xf32>
    %68 = arith.maximumf %66, %67 : vector<64x1xf32>
    %69 = math.rsqrt %68 : vector<64x1xf32>
    %70 = vector.broadcast %69 : vector<64x1xf32> to vector<64x32xf32>
    %71 = arith.mulf %63, %70 : vector<64x32xf32>
    %cst_39 = arith.constant 0.000000e+00 : f32
    %72 = vector.broadcast %cst_39 : f32 to vector<64x32xf32>
    %73 = arith.maximumf %71, %72 : vector<64x32xf32>
    %74 = arith.addf %52, %73 : vector<64x32xf32>
    %cst_40 = arith.constant dense<0.000000e+00> : vector<8x32xf32>
    %75 = tpu.matmul %21, %74, %cst_40 {dimension_numbers = #tpu.dot_dimension_numbers<[1], [0], [0], [1], [0, 0, 1, 1], [], []>} : vector<8x64xf32>, vector<64x32xf32>, vector<8x32xf32> -> vector<8x32xf32>
    %76 = vector.extract_strided_slice %22 {offsets = [3, 0], sizes = [1, 32], strides = [1, 1]} : vector<5x32xf32> to vector<1x32xf32>
    %77 = vector.extract_strided_slice %22 {offsets = [4, 0], sizes = [1, 32], strides = [1, 1]} : vector<5x32xf32> to vector<1x32xf32>
    %78 = arith.mulf %75, %75 : vector<8x32xf32>
    %cst_41 = arith.constant dense<0.000000e+00> : vector<8xf32>
    %79 = vector.multi_reduction <add>, %78, %cst_41 [1] : vector<8x32xf32> to vector<8xf32>
    %80 = vector.shape_cast %79 : vector<8xf32> to vector<8x1xf32>
    %c5 = arith.constant 5 : index
    %c0_42 = arith.constant 0 : index
    %c0_43 = arith.constant 0 : index
    %81 = vector.load %arg4[%c5, %c0_42, %c0_43] : memref<6x32x32xf32, #tpu.memory_space<vmem>>, vector<1x32x32xf32>
    %82 = vector.shape_cast %81 : vector<1x32x32xf32> to vector<32x32xf32>
    %cst_44 = arith.constant dense<0.000000e+00> : vector<8x32xf32>
    %83 = tpu.matmul %75, %82, %cst_44 {dimension_numbers = #tpu.dot_dimension_numbers<[1], [0], [0], [1], [0, 0, 1, 1], [], []>} : vector<8x32xf32>, vector<32x32xf32>, vector<8x32xf32> -> vector<8x32xf32>
    %84 = vector.broadcast %80 : vector<8x1xf32> to vector<8x32xf32>
    %85 = vector.broadcast %76 : vector<1x32xf32> to vector<8x32xf32>
    %86 = arith.addf %84, %85 : vector<8x32xf32>
    %cst_45 = arith.constant 2.000000e+00 : f32
    %87 = vector.broadcast %cst_45 : f32 to vector<8x32xf32>
    %88 = arith.mulf %87, %83 : vector<8x32xf32>
    %89 = arith.subf %86, %88 : vector<8x32xf32>
    %cst_46 = arith.constant 0.000000e+00 : f32
    %90 = vector.broadcast %cst_46 : f32 to vector<8x32xf32>
    %91 = arith.maximumf %89, %90 : vector<8x32xf32>
    %cst_47 = arith.constant 1.000000e+00 : f32
    %92 = vector.broadcast %cst_47 : f32 to vector<8x32xf32>
    %93 = arith.addf %91, %92 : vector<8x32xf32>
    %cst_48 = arith.constant 9.99999996E-13 : f32
    %94 = vector.broadcast %cst_48 : f32 to vector<8x32xf32>
    %95 = arith.addf %91, %94 : vector<8x32xf32>
    %96 = arith.divf %93, %95 : vector<8x32xf32>
    %97 = math.log %96 : vector<8x32xf32>
    %98 = vector.broadcast %77 : vector<1x32xf32> to vector<8x32xf32>
    %99 = arith.mulf %97, %98 : vector<8x32xf32>
    %cst_49 = arith.constant dense<0.000000e+00> : vector<8xf32>
    %100 = vector.multi_reduction <add>, %99, %cst_49 [1] : vector<8x32xf32> to vector<8xf32>
    %101 = vector.shape_cast %100 : vector<8xf32> to vector<8x1xf32>
    %102 = arith.negf %101 : vector<8x1xf32>
    %103 = math.exp %102 : vector<8x1xf32>
    %cst_50 = arith.constant 1.000000e+00 : f32
    %104 = vector.broadcast %cst_50 : f32 to vector<8x1xf32>
    %105 = arith.addf %104, %103 : vector<8x1xf32>
    %106 = arith.divf %104, %105 : vector<8x1xf32>
    %107 = vector.shape_cast %106 : vector<8x1xf32> to vector<8x1xf32>
    %108 = vector.broadcast %107 : vector<8x1xf32> to vector<8x128xf32>
    %c0_51 = arith.constant 0 : index
    %c0_52 = arith.constant 0 : index
    %c0_53 = arith.constant 0 : index
    %109 = vector.load %arg6[%c0_51, %c0_52, %c0_53] : memref<1x8x128xf32, #tpu.memory_space<vmem>>, vector<1x8x128xf32>
    %110 = vector.shape_cast %109 : vector<1x8x128xf32> to vector<8x128xf32>
    %111 = vector.shape_cast %108 : vector<8x128xf32> to vector<1x8x128xf32>
    tpu.vector_store %arg6[%c0_51, %c0_52, %c0_53], %111 {strides = array<i32>} : memref<1x8x128xf32, #tpu.memory_space<vmem>>, vector<1x8x128xf32>,
    return
  }
  func.func @transform_0(%arg0: i32) -> (i32, i32, i32) {
    %c0_i32 = arith.constant 0 : i32
    %c0_i32_0 = arith.constant 0 : i32
    %c0_i32_1 = arith.constant 0 : i32
    return %arg0, %c0_i32, %c0_i32_0 : i32, i32, i32
  }
  func.func @transform_1(%arg0: i32) -> (i32, i32, i32) {
    %c0_i32 = arith.constant 0 : i32
    %c0_i32_0 = arith.constant 0 : i32
    %c0_i32_1 = arith.constant 0 : i32
    return %arg0, %c0_i32, %c0_i32_0 : i32, i32, i32
  }
  func.func @transform_2(%arg0: i32) -> (i32, i32, i32) {
    %c0_i32 = arith.constant 0 : i32
    %c0_i32_0 = arith.constant 0 : i32
    %c0_i32_1 = arith.constant 0 : i32
    return %arg0, %c0_i32, %c0_i32_0 : i32, i32, i32
  }
  func.func @transform_3(%arg0: i32) -> (i32, i32, i32) {
    %c0_i32 = arith.constant 0 : i32
    %c0_i32_0 = arith.constant 0 : i32
    %c0_i32_1 = arith.constant 0 : i32
    %c0_i32_2 = arith.constant 0 : i32
    return %c0_i32, %c0_i32_0, %c0_i32_1 : i32, i32, i32
  }
  func.func @transform_4(%arg0: i32) -> (i32, i32) {
    %c0_i32 = arith.constant 0 : i32
    %c0_i32_0 = arith.constant 0 : i32
    %c0_i32_1 = arith.constant 0 : i32
    return %c0_i32, %c0_i32_0 : i32, i32
  }
  func.func @transform_5(%arg0: i32) -> (i32, i32, i32) {
    %c0_i32 = arith.constant 0 : i32
    %c0_i32_0 = arith.constant 0 : i32
    %c0_i32_1 = arith.constant 0 : i32
    return %arg0, %c0_i32, %c0_i32_0 : i32, i32, i32
  }
}

</mosaic_0001>

<llo_original>
// kernel: tpu_custom_call.1
$region0: #{tpu_custom_call.1}
  #allocation0 [shape = 'u32[]', space=smem, size = 0x4, offset = 0x4, fixed_abs, tag = 'smem constant byte address 0x4 - core index']
  #allocation1 [shape = 'u32[144,128]{1,0:T(1,128)}', space=vmem, size = 0x12000, scoped, tag = 'internal scratch']
  %s0 = inlined_call_operand.vmem [shape: f32[2,64,32], index: 0, kind: input, shape index: {}]
  %s1 = inlined_call_operand.hbm [shape: f32[2,64,64], index: 1, kind: input, shape index: {}]
  %s2 = inlined_call_operand.hbm [shape: f32[2,8,64], index: 2, kind: input, shape index: {}]
  %s3 = inlined_call_operand.vmem [shape: f32[6,32,32], index: 3, kind: input, shape index: {}]
  %s4 = inlined_call_operand.vmem [shape: f32[5,32], index: 4, kind: input, shape index: {}]
  %s5 = inlined_call_operand.hbm [shape: f32[2,8,128], index: 5, kind: output, shape index: {}]
  %s6 = sld [smem:[#allocation0]]
  $region61: #{tpu_custom_call.1} parent=0
    _
  %s8 = ssub.s32 1, %s6
  %s9 = scalar_select 0, %s8, %s6
  $region1: #{tpu_custom_call.1} parent=0
    #allocation2 [shape = 'u8[65536]{0}', space=vmem, size = 0x10000, scoped, tag = 'input window, operand 1']
    #allocation3 [shape = 's32[2]{0}', space=sflag, size = 0x8, scoped, tag = 'scoped memory for tpu_custom_call.1']
    #allocation4 [shape = 's32[2]{0}', space=sflag, size = 0x8, scoped, tag = 'scoped memory for tpu_custom_call.1']
    #allocation5 [shape = 'u8[8192]{0}', space=vmem, size = 0x2000, scoped, tag = 'input window, operand 2']
    #allocation6 [shape = 's32[2]{0}', space=sflag, size = 0x8, scoped, tag = 'scoped memory for tpu_custom_call.1']
    #allocation7 [shape = 'u8[8192]{0}', space=vmem, size = 0x2000, scoped, tag = 'output window, operand 0']
    %10 = vsyncpa [#allocation3], 0
    %s11 = scalar_lea.sflag [#allocation3], 1
    %12 = vsyncpa %s11, 0
    %13 = vsyncpa [#allocation6], 0
    %s14 = scalar_lea.sflag [#allocation6], 1
    %15 = vsyncpa %s14, 0
    %16 = vsyncpa [#allocation4], 0
    %s17 = scalar_lea.sflag [#allocation4], 1
    %18 = vsyncpa %s17, 0
    loop: start=0, step=1, limit=4
    $region2: #{tpu_custom_call.1} parent=1 // loop_pre_header
      _
    $region3: #{tpu_custom_call.1} parent=1 // loop_header
      %s20 = sphi 0, %s24
      %p21 = scmp.ge.s32.totalorder %s20, 4
      %s30 = sphi 0, %s32
      %s33 = sphi 0, %s30
      %s34 = sphi 0, %s33
      %s50 = sphi 0, %s34
      %s56 = sphi 0, %s58
      %s59 = sphi 0, %s56
      %s60 = sphi 0, %s59
      %s76 = sphi 0, %s60
      %s82 = sphi 0, %s84
      %s85 = sphi 0, %s82
      %s86 = sphi 0, %s85
      %s102 = sphi 0, %s86
      %s106 = sphi 0, %s106
      %s108 = sphi 0, %s106
      %s109 = sphi 0, %s108
      %s123 = sphi 0, %s109
      %s127 = sphi 0, %s127
      %s129 = sphi 0, %s127
      %s130 = sphi 0, %s129
      %s144 = sphi 0, %s130
      %s150 = sphi 0, %s152
      %s153 = sphi 0, %s150
      %s154 = sphi 0, %s153
      %s170 = sphi 0, %s154
    $region4: #{tpu_custom_call.1} parent=1 // loop_header_branch
      %23 = sbr.rel (%p21) target = $region8
    $region5: #{tpu_custom_call.1} parent=1 // loop_body
      %s25 = ssub.s32 %s20, 1
      %s26 = ssub.s32 %s20, 2
      %s27 = sadd.s32 %s20, 1
      %s28 = ssub.s32 %s20, %s27
      %p29 = scmp.eq.s32.totalorder %s28, 0
      %s31 = sadd.s32 %s30, 1
      %s32 = scalar_select %p29, %s30, %s31
      %p35 = pneg %p29
      %p36 = scmp.eq.s32.totalorder %s20, 1
      %p37 = por %p35, %p36
      %p38 = scmp.ne.s32.totalorder %s30, %s33
      %p39 = scmp.eq.s32.totalorder %s20, 0
      %p40 = por %p38, %p39
      %p41 = scmp.ne.s32.totalorder %s30, %s33
      %p42 = scmp.eq.s32.totalorder %s25, 1
      %p43 = por %p41, %p42
      %p44 = scmp.ne.s32.totalorder %s33, %s34
      %p45 = scmp.eq.s32.totalorder %s25, 0
      %p46 = por %p44, %p45
      %p47 = scmp.ne.s32.totalorder %s33, %s34
      %p48 = scmp.eq.s32.totalorder %s26, 1
      %p49 = por %p47, %p48
      %p51 = scmp.ne.s32.totalorder %s34, %s50
      %p52 = scmp.eq.s32.totalorder %s26, 0
      %p53 = por %p51, %p52
      %s54 = ssub.s32 %s20, %s27
      %p55 = scmp.eq.s32.totalorder %s54, 0
      %s57 = sadd.s32 %s56, 1
      %s58 = scalar_select %p55, %s56, %s57
      %p61 = pneg %p55
      %p62 = scmp.eq.s32.totalorder %s20, 1
      %p63 = por %p61, %p62
      %p64 = scmp.ne.s32.totalorder %s56, %s59
      %p65 = scmp.eq.s32.totalorder %s20, 0
      %p66 = por %p64, %p65
      %p67 = scmp.ne.s32.totalorder %s56, %s59
      %p68 = scmp.eq.s32.totalorder %s25, 1
      %p69 = por %p67, %p68
      %p70 = scmp.ne.s32.totalorder %s59, %s60
      %p71 = scmp.eq.s32.totalorder %s25, 0
      %p72 = por %p70, %p71
      %p73 = scmp.ne.s32.totalorder %s59, %s60
      %p74 = scmp.eq.s32.totalorder %s26, 1
      %p75 = por %p73, %p74
      %p77 = scmp.ne.s32.totalorder %s60, %s76
      %p78 = scmp.eq.s32.totalorder %s26, 0
      %p79 = por %p77, %p78
      %s80 = ssub.s32 %s20, %s27
      %p81 = scmp.eq.s32.totalorder %s80, 0
      %s83 = sadd.s32 %s82, 1
      %s84 = scalar_select %p81, %s82, %s83
      %p87 = pneg %p81
      %p88 = scmp.eq.s32.totalorder %s20, 1
      %p89 = por %p87, %p88
      %p90 = scmp.ne.s32.totalorder %s82, %s85
      %p91 = scmp.eq.s32.totalorder %s20, 0
      %p92 = por %p90, %p91
      %p93 = scmp.ne.s32.totalorder %s82, %s85
      %p94 = scmp.eq.s32.totalorder %s25, 1
      %p95 = por %p93, %p94
      %p96 = scmp.ne.s32.totalorder %s85, %s86
      %p97 = scmp.eq.s32.totalorder %s25, 0
      %p98 = por %p96, %p97
      %p99 = scmp.ne.s32.totalorder %s85, %s86
      %p100 = scmp.eq.s32.totalorder %s26, 1
      %p101 = por %p99, %p100
      %p103 = scmp.ne.s32.totalorder %s86, %s102
      %p104 = scmp.eq.s32.totalorder %s26, 0
      %p105 = por %p103, %p104
      %s107 = sadd.s32 %s106, 1
      %p110 = scmp.eq.s32.totalorder %s20, 1
      %p111 = scmp.ne.s32.totalorder %s106, %s108
      %p112 = scmp.eq.s32.totalorder %s20, 0
      %p113 = por %p111, %p112
      %p114 = scmp.ne.s32.totalorder %s106, %s108
      %p115 = scmp.eq.s32.totalorder %s25, 1
      %p116 = por %p114, %p115
      %p117 = scmp.ne.s32.totalorder %s108, %s109
      %p118 = scmp.eq.s32.totalorder %s25, 0
      %p119 = por %p117, %p118
      %p120 = scmp.ne.s32.totalorder %s108, %s109
      %p121 = scmp.eq.s32.totalorder %s26, 1
      %p122 = por %p120, %p121
      %p124 = scmp.ne.s32.totalorder %s109, %s123
      %p125 = scmp.eq.s32.totalorder %s26, 0
      %p126 = por %p124, %p125
      %s128 = sadd.s32 %s127, 1
      %p131 = scmp.eq.s32.totalorder %s20, 1
      %p132 = scmp.ne.s32.totalorder %s127, %s129
      %p133 = scmp.eq.s32.totalorder %s20, 0
      %p134 = por %p132, %p133
      %p135 = scmp.ne.s32.totalorder %s127, %s129
      %p136 = scmp.eq.s32.totalorder %s25, 1
      %p137 = por %p135, %p136
      %p138 = scmp.ne.s32.totalorder %s129, %s130
      %p139 = scmp.eq.s32.totalorder %s25, 0
      %p140 = por %p138, %p139
      %p141 = scmp.ne.s32.totalorder %s129, %s130
      %p142 = scmp.eq.s32.totalorder %s26, 1
      %p143 = por %p141, %p142
      %p145 = scmp.ne.s32.totalorder %s130, %s144
      %p146 = scmp.eq.s32.totalorder %s26, 0
      %p147 = por %p145, %p146
      %s148 = ssub.s32 %s20, %s27
      %p149 = scmp.eq.s32.totalorder %s148, 0
      %s151 = sadd.s32 %s150, 1
      %s152 = scalar_select %p149, %s150, %s151
      %p155 = pneg %p149
      %p156 = scmp.eq.s32.totalorder %s20, 1
      %p157 = por %p155, %p156
      %p158 = scmp.ne.s32.totalorder %s150, %s153
      %p159 = scmp.eq.s32.totalorder %s20, 0
      %p160 = por %p158, %p159
      %p161 = scmp.ne.s32.totalorder %s150, %s153
      %p162 = scmp.eq.s32.totalorder %s25, 1
      %p163 = por %p161, %p162
      %p164 = scmp.ne.s32.totalorder %s153, %s154
      %p165 = scmp.eq.s32.totalorder %s25, 0
      %p166 = por %p164, %p165
      %p167 = scmp.ne.s32.totalorder %s153, %s154
      %p168 = scmp.eq.s32.totalorder %s26, 1
      %p169 = por %p167, %p168
      %p171 = scmp.ne.s32.totalorder %s154, %s170
      %p172 = scmp.eq.s32.totalorder %s26, 0
      %p173 = por %p171, %p172
      %p174 = scmp.le.s32.totalorder 1, %s20
      %p175 = scmp.lt.s32.totalorder %s20, 3
      %p176 = pnand %p174, %p175
      %p177 = pneg %p176
      // Predicated region
      $region9: #{tpu_custom_call.1} parent=5 // pred_check
        _
      $region10: #{tpu_custom_call.1} parent=5 // pred_check_branch
        %179 = sbr.rel (%p176) target = $region12
      $region11: #{tpu_custom_call.1} parent=5 // pred_region
        %s180 = ssub.s32 %s20, 1
        // Predicated region
        $region13: #{tpu_custom_call.1} parent=11 // pred_check
          %p181 = pneg %p119
        $region14: #{tpu_custom_call.1} parent=11 // pred_check_branch
          %183 = sbr.rel (%p181) target = $region16
        $region15: #{tpu_custom_call.1} parent=11 // pred_region
          _
        $region16: #{tpu_custom_call.1} parent=11 // pred_fallthru
          _
        // Predicated region
        $region17: #{tpu_custom_call.1} parent=11 // pred_check
          %p184 = pneg %p140
        $region18: #{tpu_custom_call.1} parent=11 // pred_check_branch
          %186 = sbr.rel (%p184) target = $region20
        $region19: #{tpu_custom_call.1} parent=11 // pred_region
          _
        $region20: #{tpu_custom_call.1} parent=11 // pred_fallthru
          _
      $region12: #{tpu_custom_call.1} parent=5 // pred_fallthru
        _
      %p187 = scmp.lt.s32.totalorder %s20, 2
      // Predicated region
      $region21: #{tpu_custom_call.1} parent=5 // pred_check
        %p188 = pneg %p187
      $region22: #{tpu_custom_call.1} parent=5 // pred_check_branch
        %190 = sbr.rel (%p188) target = $region24
      $region23: #{tpu_custom_call.1} parent=5 // pred_region
        // Predicated region
        $region25: #{tpu_custom_call.1} parent=23 // pred_check
          %p191 = pneg %p40
        $region26: #{tpu_custom_call.1} parent=23 // pred_check_branch
          %193 = sbr.rel (%p191) target = $region28
        $region27: #{tpu_custom_call.1} parent=23 // pred_region
          %p194 = scmp.lt.s32.totalorder %s20, 1
          %s195 = scalar_select %p194, %s20, 1
          %s196 = smul.addr %s195, 8
          %s197 = smul.addr %s196, 8
          %s198 = scalar_lea.vmem %s0, %s197
        $region28: #{tpu_custom_call.1} parent=23 // pred_fallthru
          _
        // Predicated region
        $region29: #{tpu_custom_call.1} parent=23 // pred_check
          %p199 = pneg %p66
        $region30: #{tpu_custom_call.1} parent=23 // pred_check_branch
          %201 = sbr.rel (%p199) target = $region32
        $region31: #{tpu_custom_call.1} parent=23 // pred_region
          %s202 = sand.u32 %s56, 1
          %s203 = scalar_lea.sflag [#allocation3], %s202
          %s204 = sand.u32 %s56, 1
          %s205 = smul.addr %s204, 64
          %s206 = scalar_lea.vmem [#allocation2], %s205
          %s208 = ssub.s32 1024, 1024
          %209 = vsyncadd %s203, %s208
          %s210 = smul.addr %s20, 8
          %s211 = smul.addr %s210, 128
          %s212 = scalar_lea.hbm %s1, %s211
          %s213 = sshll.u32 %s206, 4
          %s214 = int_to_ptr.vmem [resolvable:$true] %s213
          %219 = dma.hbm_to_vmem [thread:$0]  %s212, 1024, %s214, %s203, 128, 128, 8
        $region32: #{tpu_custom_call.1} parent=23 // pred_fallthru
          _
        // Predicated region
        $region33: #{tpu_custom_call.1} parent=23 // pred_check
          %p220 = pneg %p92
        $region34: #{tpu_custom_call.1} parent=23 // pred_check_branch
          %222 = sbr.rel (%p220) target = $region36
        $region35: #{tpu_custom_call.1} parent=23 // pred_region
          %s223 = sand.u32 %s82, 1
          %s224 = scalar_lea.sflag [#allocation6], %s223
          %s225 = sand.u32 %s82, 1
          %s226 = smul.addr %s225, 8
          %s227 = scalar_lea.vmem [#allocation5], %s226
          %s229 = ssub.s32 128, 128
          %230 = vsyncadd %s224, %s229
          %s231 = smul.addr %s20, 128
          %s232 = scalar_lea.hbm %s2, %s231
          %s234 = sshll.u32 %s227, 4
          %s235 = int_to_ptr.vmem [resolvable:$true] %s234
          %237 = dma.hbm_to_vmem [thread:$0]  %s232, 128, %s235, %s224
        $region36: #{tpu_custom_call.1} parent=23 // pred_fallthru
          _
      $region24: #{tpu_custom_call.1} parent=5 // pred_fallthru
        _
      %p238 = scmp.le.s32.totalorder 1, %s20
      %p239 = scmp.lt.s32.totalorder %s20, 3
      %p240 = pnand %p238, %p239
      %p241 = pneg %p240
      // Predicated region
      $region37: #{tpu_custom_call.1} parent=5 // pred_check
        _
      $region38: #{tpu_custom_call.1} parent=5 // pred_check_branch
        %243 = sbr.rel (%p240) target = $region40
      $region39: #{tpu_custom_call.1} parent=5 // pred_region
        %s244 = ssub.s32 %s20, 1
        %s245 = sand.u32 %s59, 1
        %s246 = scalar_lea.sflag [#allocation3], %s245
        %s247 = sand.u32 %s59, 1
        %s248 = smul.addr %s247, 64
        %s249 = scalar_lea.vmem [#allocation2], %s248
        // Predicated region
        $region41: #{tpu_custom_call.1} parent=39 // pred_check
          %p250 = pneg %p72
        $region42: #{tpu_custom_call.1} parent=39 // pred_check_branch
          %252 = sbr.rel (%p250) target = $region44
        $region43: #{tpu_custom_call.1} parent=39 // pred_region
          %253 = dma.done %s246, 1024
        $region44: #{tpu_custom_call.1} parent=39 // pred_fallthru
          _
        %s254 = sand.u32 %s85, 1
        %s255 = scalar_lea.sflag [#allocation6], %s254
        %s256 = sand.u32 %s85, 1
        %s257 = smul.addr %s256, 8
        %s258 = scalar_lea.vmem [#allocation5], %s257
        // Predicated region
        $region45: #{tpu_custom_call.1} parent=39 // pred_check
          %p259 = pneg %p98
        $region46: #{tpu_custom_call.1} parent=39 // pred_check_branch
          %261 = sbr.rel (%p259) target = $region48
        $region47: #{tpu_custom_call.1} parent=39 // pred_region
          %262 = dma.done %s255, 128
        $region48: #{tpu_custom_call.1} parent=39 // pred_fallthru
          _
        %p263 = scmp.lt.s32.totalorder %s25, 1
        %s264 = scalar_select %p263, %s25, 1
        %s265 = smul.addr %s264, 8
        %s266 = smul.addr %s265, 8
        %s267 = scalar_lea.vmem %s0, %s266
        %p268 = pneg %p46
        %p269 = pneg %p43
        %s270 = sand.u32 %s59, 1
        %s271 = scalar_lea.sflag [#allocation3], %s270
        %s272 = sand.u32 %s59, 1
        %s273 = smul.addr %s272, 64
        %s274 = scalar_lea.vmem [#allocation2], %s273
        %p275 = pneg %p72
        %p276 = pneg %p69
        %s277 = sand.u32 %s85, 1
        %s278 = scalar_lea.sflag [#allocation6], %s277
        %s279 = sand.u32 %s85, 1
        %s280 = smul.addr %s279, 8
        %s281 = scalar_lea.vmem [#allocation5], %s280
        %p282 = pneg %p98
        %p283 = pneg %p95
        %p284 = pneg %p119
        %p285 = pneg %p116
        %p286 = pneg %p140
        %p287 = pneg %p137
        %p288 = pneg %p166
        %p289 = pneg %p163
        %s290 = sand.u32 %s153, 1
        %s291 = scalar_lea.sflag [#allocation4], %s290
        %s292 = sand.u32 %s153, 1
        %s293 = smul.addr %s292, 8
        %s294 = scalar_lea.vmem [#allocation7], %s293
        %p295 = scmp.lt.s32.totalorder %s25, 1
        %s296 = scalar_select %p295, %s25, 1
        %s297 = smul.addr %s296, 8
        %s298 = smul.addr %s297, 8
        %s299 = scalar_lea.vmem %s0, %s298
        %v300 = vld [vmem:[%s249] sm:$0xff]
        %v301 = vld [vmem:[%s249 + $0x8] sm:$0xff]
        %v302 = vld [vmem:[%s249 + $0x10] sm:$0xff]
        %v303 = vld [vmem:[%s249 + $0x18] sm:$0xff]
        %v304 = vld [vmem:[%s249 + $0x20] sm:$0xff]
        %v305 = vld [vmem:[%s249 + $0x28] sm:$0xff]
        %v306 = vld [vmem:[%s249 + $0x30] sm:$0xff]
        %v307 = vld [vmem:[%s249 + $0x38] sm:$0xff]
        %vm308 = vcmask 523264
        %v309 = vsel %vm308, %v300, 0.0
        %310 = vadd.xlane.f32.xlu0 %v309
        %v311 = vpop.xlane.xlu0 %310
        %v312 = vsel %vm308, %v301, 0.0
        %313 = vadd.xlane.f32.xlu0 %v312
        %v314 = vpop.xlane.xlu0 %313
        %v315 = vsel %vm308, %v302, 0.0
        %316 = vadd.xlane.f32.xlu0 %v315
        %v317 = vpop.xlane.xlu0 %316
        %v318 = vsel %vm308, %v303, 0.0
        %319 = vadd.xlane.f32.xlu0 %v318
        %v320 = vpop.xlane.xlu0 %319
        %v321 = vsel %vm308, %v304, 0.0
        %322 = vadd.xlane.f32.xlu0 %v321
        %v323 = vpop.xlane.xlu0 %322
        %v324 = vsel %vm308, %v305, 0.0
        %325 = vadd.xlane.f32.xlu0 %v324
        %v326 = vpop.xlane.xlu0 %325
        %v327 = vsel %vm308, %v306, 0.0
        %328 = vadd.xlane.f32.xlu0 %v327
        %v329 = vpop.xlane.xlu0 %328
        %v330 = vsel %vm308, %v307, 0.0
        %331 = vadd.xlane.f32.xlu0 %v330
        %v332 = vpop.xlane.xlu0 %331
        %vm333 = vcmp.gt.f32.partialorder %v311, 0.0
        %vm334 = vcmp.gt.f32.partialorder %v314, 0.0
        %vm335 = vcmp.gt.f32.partialorder %v317, 0.0
        %vm336 = vcmp.gt.f32.partialorder %v320, 0.0
        %vm337 = vcmp.gt.f32.partialorder %v323, 0.0
        %vm338 = vcmp.gt.f32.partialorder %v326, 0.0
        %vm339 = vcmp.gt.f32.partialorder %v329, 0.0
        %vm340 = vcmp.gt.f32.partialorder %v332, 0.0
        %v341 = vmax.f32 %v311, 1.0
        %v342 = vmax.f32 %v314, 1.0
        %v343 = vmax.f32 %v317, 1.0
        %v344 = vmax.f32 %v320, 1.0
        %v345 = vmax.f32 %v323, 1.0
        %v346 = vmax.f32 %v326, 1.0
        %v347 = vmax.f32 %v329, 1.0
        %v348 = vmax.f32 %v332, 1.0
        %v349 = vrcp.pop %v341
        %v350 = vmul.f32 1.0, %v349
        %v351 = vrcp.pop %v342
        %v352 = vmul.f32 1.0, %v351
        %v353 = vrcp.pop %v343
        %v354 = vmul.f32 1.0, %v353
        %v355 = vrcp.pop %v344
        %v356 = vmul.f32 1.0, %v355
        %v357 = vrcp.pop %v345
        %v358 = vmul.f32 1.0, %v357
        %v359 = vrcp.pop %v346
        %v360 = vmul.f32 1.0, %v359
        %v361 = vrcp.pop %v347
        %v362 = vmul.f32 1.0, %v361
        %v363 = vrcp.pop %v348
        %v364 = vmul.f32 1.0, %v363
        %v365 = vsel %vm333, %v350, 0.0
        %v366 = vsel %vm334, %v352, 0.0
        %v367 = vsel %vm335, %v354, 0.0
        %v368 = vsel %vm336, %v356, 0.0
        %v369 = vsel %vm337, %v358, 0.0
        %v370 = vsel %vm338, %v360, 0.0
        %v371 = vsel %vm339, %v362, 0.0
        %v372 = vsel %vm340, %v364, 0.0
        %v373 = vmul.f32 %v300, %v365
        %v374 = vmul.f32 %v301, %v366
        %v375 = vmul.f32 %v302, %v367
        %v376 = vmul.f32 %v303, %v368
        %v377 = vmul.f32 %v304, %v369
        %v378 = vmul.f32 %v305, %v370
        %v379 = vmul.f32 %v306, %v371
        %v380 = vmul.f32 %v307, %v372
        %v381 = vld [vmem:[%s258] sm:$0xff]
        %v382 = vsel %vm308, %v381, 0.0
        %383 = vadd.xlane.f32.xlu0 %v382
        %v384 = vpop.xlane.xlu0 %383
        %v385 = vmax.f32 %v384, 1.0
        %v386 = vrcp.pop %v385
        %v387 = vmul.f32 %v381, %v386
        %v388 = vld [vmem:[%s4] sm:$0x1f]
        %v389 = vld [vmem:[%s299] sm:$0xff]
        %v390 = vld [vmem:[%s299 + $0x8] sm:$0xff]
        %v391 = vld [vmem:[%s299 + $0x10] sm:$0xff]
        %v392 = vld [vmem:[%s299 + $0x18] sm:$0xff]
        %v393 = vld [vmem:[%s299 + $0x20] sm:$0xff]
        %v394 = vld [vmem:[%s299 + $0x28] sm:$0xff]
        %v395 = vld [vmem:[%s299 + $0x30] sm:$0xff]
        %v396 = vld [vmem:[%s299 + $0x38] sm:$0xff]
        %v397 = vld [vmem:[%s3] sm:$0xff]
        %v398 = vld [vmem:[%s3 + $0x8] sm:$0xff]
        %v399 = vld [vmem:[%s3 + $0x10] sm:$0xff]
        %v400 = vld [vmem:[%s3 + $0x18] sm:$0xff]
        %v401 = vlaneseq
        %v402 = vshrl.u32 %v401, 7
        %v403 = vsub.s32 0, %v402
        %v404 = vrot.slane %v388, %v403
        %vm405 = vcmask 261120
        %v407 = vsel %vm405, %v389, 0
        %v410 = vsel %vm405, %v390, 0
        %v413 = vsel %vm405, %v391, 0
        %v416 = vsel %vm405, %v392, 0
        %v419 = vsel %vm405, %v393, 0
        %v422 = vsel %vm405, %v394, 0
        %v425 = vsel %vm405, %v395, 0
        %v428 = vsel %vm405, %v396, 0
        %430 = vmatprep.subr.mxu0 0.0
        %431 = vmatpush1.msra.mxu0 %v397
        %432 = vmatprep.subr.mxu0 0.0
        %433 = vmatpush1.msra.mxu0 %v398
        %434 = vmatprep.subr.mxu0 0.0
        %435 = vmatpush1.msra.mxu0 %v399
        %436 = vmatprep.subr.mxu0 0.0
        %437 = vmatpush1.msra.mxu0 %v400
        %438 = vmatprep.subr.mxu0 0.0
        %439 = vmatpush1.msra.mxu0 0.0
        %440 = vmatprep.subr.mxu0 0.0
        %441 = vmatpush1.msra.mxu0 0.0
        %442 = vmatprep.subr.mxu0 0.0
        %443 = vmatpush1.msra.mxu0 0.0
        %444 = vmatprep.subr.mxu0 0.0
        %445 = vmatpush1.msra.mxu0 0.0
        %446 = vmatprep.subr.mxu0 0.0
        %447 = vmatpush1.msra.mxu0 0.0
        %448 = vmatprep.subr.mxu0 0.0
        %449 = vmatpush1.msra.mxu0 0.0
        %450 = vmatprep.subr.mxu0 0.0
        %451 = vmatpush1.msra.mxu0 0.0
        %452 = vmatprep.subr.mxu0 0.0
        %453 = vmatpush1.msra.mxu0 0.0
        %454 = vmatprep.subr.mxu0 0.0
        %455 = vmatpush1.msra.mxu0 0.0
        %456 = vmatprep.subr.mxu0 0.0
        %457 = vmatpush1.msra.mxu0 0.0
        %458 = vmatprep.subr.mxu0 0.0
        %459 = vmatpush1.msra.mxu0 0.0
        %460 = vmatprep.subr.mxu0 0.0
        %461 = vmatpush1.msra.mxu0 0.0
        %462 = vmatprep.subr.mxu0 0.0
        %463 = vmatpush1.msra.mxu0 0.0
        %464 = vmatprep.subr.mxu0 0.0
        %465 = vmatpush1.msra.mxu0 0.0
        %466 = vmatprep.subr.mxu0 0.0
        %467 = vmatpush1.msra.mxu0 0.0
        %468 = vmatprep.subr.mxu0 0.0
        %469 = vmatpush1.msra.mxu0 0.0
        %470 = vmatprep.subr.mxu0 0.0
        %471 = vmatpush1.msra.mxu0 0.0
        %472 = vmatprep.subr.mxu0 0.0
        %473 = vmatpush1.msra.mxu0 0.0
        %474 = vmatprep.subr.mxu0 0.0
        %475 = vmatpush1.msra.mxu0 0.0
        %476 = vmatprep.subr.mxu0 0.0
        %477 = vmatpush1.msra.mxu0 0.0
        %478 = vmatprep.subr.mxu0 0.0
        %479 = vmatpush1.msra.mxu0 0.0
        %480 = vmatprep.subr.mxu0 0.0
        %481 = vmatpush1.msra.mxu0 0.0
        %482 = vmatprep.subr.mxu0 0.0
        %483 = vmatpush1.msra.mxu0 0.0
        %484 = vmatprep.subr.mxu0 0.0
        %485 = vmatpush1.msra.mxu0 0.0
        %486 = vmatprep.subr.mxu0 0.0
        %487 = vmatpush1.msra.mxu0 0.0
        %488 = vmatprep.subr.mxu0 0.0
        %489 = vmatpush1.msra.mxu0 0.0
        %490 = vmatprep.subr.mxu0 0.0
        %491 = vmatpush1.msra.mxu0 0.0
        %492 = vmatprep.subr.mxu0 0.0
        %493 = vmatpush1.msra.mxu0 0.0
        %494 = vmatprep.mubr.f32.mxu0 0.0
        %495 = vmatmul.mubr.f32.gmra.mrb[0].mxu0 %v407
        %v496 = vpop.f32.mrb[0].mxu0
        %v497 = vadd.f32 %v404, %v496
        %v498 = vpop.f32.mrb[0].mxu0
        %499 = vmatprep.mubr.f32.mxu0 0.0
        %500 = vmatmul.mubr.f32.gmra.mrb[0].mxu0 %v410
        %v501 = vpop.f32.mrb[0].mxu0
        %v502 = vadd.f32 %v404, %v501
        %v503 = vpop.f32.mrb[0].mxu0
        %504 = vmatprep.mubr.f32.mxu0 0.0
        %505 = vmatmul.mubr.f32.gmra.mrb[0].mxu0 %v413
        %v506 = vpop.f32.mrb[0].mxu0
        %v507 = vadd.f32 %v404, %v506
        %v508 = vpop.f32.mrb[0].mxu0
        %509 = vmatprep.mubr.f32.mxu0 0.0
        %510 = vmatmul.mubr.f32.gmra.mrb[0].mxu0 %v416
        %v511 = vpop.f32.mrb[0].mxu0
        %v512 = vadd.f32 %v404, %v511
        %v513 = vpop.f32.mrb[0].mxu0
        %514 = vmatprep.mubr.f32.mxu0 0.0
        %515 = vmatmul.mubr.f32.gmra.mrb[0].mxu0 %v419
        %v516 = vpop.f32.mrb[0].mxu0
        %v517 = vadd.f32 %v404, %v516
        %v518 = vpop.f32.mrb[0].mxu0
        %519 = vmatprep.mubr.f32.mxu0 0.0
        %520 = vmatmul.mubr.f32.gmra.mrb[0].mxu0 %v422
        %v521 = vpop.f32.mrb[0].mxu0
        %v522 = vadd.f32 %v404, %v521
        %v523 = vpop.f32.mrb[0].mxu0
        %524 = vmatprep.mubr.f32.mxu0 0.0
        %525 = vmatmul.mubr.f32.gmra.mrb[0].mxu0 %v425
        %v526 = vpop.f32.mrb[0].mxu0
        %v527 = vadd.f32 %v404, %v526
        %v528 = vpop.f32.mrb[0].mxu0
        %529 = vmatprep.mubr.f32.mxu0 0.0
        %530 = vmatmul.mubr.f32.gmra.mrb[0].mxu0 %v428
        %v531 = vpop.f32.mrb[0].mxu0
        %v532 = vadd.f32 %v404, %v531
        %v533 = vpop.f32.mrb[0].mxu0
        %534 = vdwg.mxu0
        %v536 = vsel %vm308, %v373, 0
        %v539 = vsel %vm308, %v374, 0
        %v542 = vsel %vm308, %v375, 0
        %v545 = vsel %vm308, %v376, 0
        %v548 = vsel %vm308, %v377, 0
        %v551 = vsel %vm308, %v378, 0
        %v554 = vsel %vm308, %v379, 0
        %v557 = vsel %vm308, %v380, 0
        %559 = vmatprep.subr.mxu0 0.0
        %560 = vmatpush1.msra.mxu0 %v497
        %561 = vmatprep.subr.mxu0 0.0
        %562 = vmatpush1.msra.mxu0 %v502
        %563 = vmatprep.subr.mxu0 0.0
        %564 = vmatpush1.msra.mxu0 %v507
        %565 = vmatprep.subr.mxu0 0.0
        %566 = vmatpush1.msra.mxu0 %v512
        %567 = vmatprep.subr.mxu0 0.0
        %568 = vmatpush1.msra.mxu0 %v517
        %569 = vmatprep.subr.mxu0 0.0
        %570 = vmatpush1.msra.mxu0 %v522
        %571 = vmatprep.subr.mxu0 0.0
        %572 = vmatpush1.msra.mxu0 %v527
        %573 = vmatprep.subr.mxu0 0.0
        %574 = vmatpush1.msra.mxu0 %v532
        %575 = vmatprep.subr.mxu0 0.0
        %576 = vmatpush1.msra.mxu0 0.0
        %577 = vmatprep.subr.mxu0 0.0
        %578 = vmatpush1.msra.mxu0 0.0
        %579 = vmatprep.subr.mxu0 0.0
        %580 = vmatpush1.msra.mxu0 0.0
        %581 = vmatprep.subr.mxu0 0.0
        %582 = vmatpush1.msra.mxu0 0.0
        %583 = vmatprep.subr.mxu0 0.0
        %584 = vmatpush1.msra.mxu0 0.0
        %585 = vmatprep.subr.mxu0 0.0
        %586 = vmatpush1.msra.mxu0 0.0
        %587 = vmatprep.subr.mxu0 0.0
        %588 = vmatpush1.msra.mxu0 0.0
        %589 = vmatprep.subr.mxu0 0.0
        %590 = vmatpush1.msra.mxu0 0.0
        %591 = vmatprep.subr.mxu0 0.0
        %592 = vmatpush1.msra.mxu0 0.0
        %593 = vmatprep.subr.mxu0 0.0
        %594 = vmatpush1.msra.mxu0 0.0
        %595 = vmatprep.subr.mxu0 0.0
        %596 = vmatpush1.msra.mxu0 0.0
        %597 = vmatprep.subr.mxu0 0.0
        %598 = vmatpush1.msra.mxu0 0.0
        %599 = vmatprep.subr.mxu0 0.0
        %600 = vmatpush1.msra.mxu0 0.0
        %601 = vmatprep.subr.mxu0 0.0
        %602 = vmatpush1.msra.mxu0 0.0
        %603 = vmatprep.subr.mxu0 0.0
        %604 = vmatpush1.msra.mxu0 0.0
        %605 = vmatprep.subr.mxu0 0.0
        %606 = vmatpush1.msra.mxu0 0.0
        %607 = vmatprep.subr.mxu0 0.0
        %608 = vmatpush1.msra.mxu0 0.0
        %609 = vmatprep.subr.mxu0 0.0
        %610 = vmatpush1.msra.mxu0 0.0
        %611 = vmatprep.subr.mxu0 0.0
        %612 = vmatpush1.msra.mxu0 0.0
        %613 = vmatprep.subr.mxu0 0.0
        %614 = vmatpush1.msra.mxu0 0.0
        %615 = vmatprep.subr.mxu0 0.0
        %616 = vmatpush1.msra.mxu0 0.0
        %617 = vmatprep.subr.mxu0 0.0
        %618 = vmatpush1.msra.mxu0 0.0
        %619 = vmatprep.subr.mxu0 0.0
        %620 = vmatpush1.msra.mxu0 0.0
        %621 = vmatprep.subr.mxu0 0.0
        %622 = vmatpush1.msra.mxu0 0.0
        %623 = vmatprep.mubr.f32.mxu0 0.0
        %624 = vmatmul.mubr.f32.gmra.mrb[0].mxu0 %v536
        %v625 = vpop.f32.mrb[0].mxu0
        %v626 = vadd.f32 0.0, %v625
        %v627 = vpop.f32.mrb[0].mxu0
        %628 = vmatprep.mubr.f32.mxu0 0.0
        %629 = vmatmul.mubr.f32.gmra.mrb[0].mxu0 %v539
        %v630 = vpop.f32.mrb[0].mxu0
        %v631 = vadd.f32 0.0, %v630
        %v632 = vpop.f32.mrb[0].mxu0
        %633 = vmatprep.mubr.f32.mxu0 0.0
        %634 = vmatmul.mubr.f32.gmra.mrb[0].mxu0 %v542
        %v635 = vpop.f32.mrb[0].mxu0
        %v636 = vadd.f32 0.0, %v635
        %v637 = vpop.f32.mrb[0].mxu0
        %638 = vmatprep.mubr.f32.mxu0 0.0
        %639 = vmatmul.mubr.f32.gmra.mrb[0].mxu0 %v545
        %v640 = vpop.f32.mrb[0].mxu0
        %v641 = vadd.f32 0.0, %v640
        %v642 = vpop.f32.mrb[0].mxu0
        %643 = vmatprep.mubr.f32.mxu0 0.0
        %644 = vmatmul.mubr.f32.gmra.mrb[0].mxu0 %v548
        %v645 = vpop.f32.mrb[0].mxu0
        %v646 = vadd.f32 0.0, %v645
        %v647 = vpop.f32.mrb[0].mxu0
        %648 = vmatprep.mubr.f32.mxu0 0.0
        %649 = vmatmul.mubr.f32.gmra.mrb[0].mxu0 %v551
        %v650 = vpop.f32.mrb[0].mxu0
        %v651 = vadd.f32 0.0, %v650
        %v652 = vpop.f32.mrb[0].mxu0
        %653 = vmatprep.mubr.f32.mxu0 0.0
        %654 = vmatmul.mubr.f32.gmra.mrb[0].mxu0 %v554
        %v655 = vpop.f32.mrb[0].mxu0
        %v656 = vadd.f32 0.0, %v655
        %v657 = vpop.f32.mrb[0].mxu0
        %658 = vmatprep.mubr.f32.mxu0 0.0
        %659 = vmatmul.mubr.f32.gmra.mrb[0].mxu0 %v557
        %v660 = vpop.f32.mrb[0].mxu0
        %v661 = vadd.f32 0.0, %v660
        %v662 = vpop.f32.mrb[0].mxu0
        %663 = vdwg.mxu0
        %s664 = scalar_lea.vmem %s3, 32
        %v665 = vld [vmem:[%s664] sm:$0xff]
        %v666 = vld [vmem:[%s664 + $0x8] sm:$0xff]
        %v667 = vld [vmem:[%s664 + $0x10] sm:$0xff]
        %v668 = vld [vmem:[%s664 + $0x18] sm:$0xff]
        %s669 = scalar_lea.vmem %s3, 64
        %v670 = vld [vmem:[%s669] sm:$0xff]
        %v671 = vld [vmem:[%s669 + $0x8] sm:$0xff]
        %v672 = vld [vmem:[%s669 + $0x10] sm:$0xff]
        %v673 = vld [vmem:[%s669 + $0x18] sm:$0xff]
        %v675 = vsel %vm405, %v626, 0
        %v678 = vsel %vm405, %v631, 0
        %v681 = vsel %vm405, %v636, 0
        %v684 = vsel %vm405, %v641, 0
        %v687 = vsel %vm405, %v646, 0
        %v690 = vsel %vm405, %v651, 0
        %v693 = vsel %vm405, %v656, 0
        %v696 = vsel %vm405, %v661, 0
        %698 = vmatprep.subr.mxu0 0.0
        %699 = vmatpush1.msra.mxu0 %v670
        %700 = vmatprep.subr.mxu0 0.0
        %701 = vmatpush1.msra.mxu0 %v671
        %702 = vmatprep.subr.mxu0 0.0
        %703 = vmatpush1.msra.mxu0 %v672
        %704 = vmatprep.subr.mxu0 0.0
        %705 = vmatpush1.msra.mxu0 %v673
        %706 = vmatprep.subr.mxu0 0.0
        %707 = vmatpush1.msra.mxu0 0.0
        %708 = vmatprep.subr.mxu0 0.0
        %709 = vmatpush1.msra.mxu0 0.0
        %710 = vmatprep.subr.mxu0 0.0
        %711 = vmatpush1.msra.mxu0 0.0
        %712 = vmatprep.subr.mxu0 0.0
        %713 = vmatpush1.msra.mxu0 0.0
        %714 = vmatprep.subr.mxu0 0.0
        %715 = vmatpush1.msra.mxu0 0.0
        %716 = vmatprep.subr.mxu0 0.0
        %717 = vmatpush1.msra.mxu0 0.0
        %718 = vmatprep.subr.mxu0 0.0
        %719 = vmatpush1.msra.mxu0 0.0
        %720 = vmatprep.subr.mxu0 0.0
        %721 = vmatpush1.msra.mxu0 0.0
        %722 = vmatprep.subr.mxu0 0.0
        %723 = vmatpush1.msra.mxu0 0.0
        %724 = vmatprep.subr.mxu0 0.0
        %725 = vmatpush1.msra.mxu0 0.0
        %726 = vmatprep.subr.mxu0 0.0
        %727 = vmatpush1.msra.mxu0 0.0
        %728 = vmatprep.subr.mxu0 0.0
        %729 = vmatpush1.msra.mxu0 0.0
        %730 = vmatprep.subr.mxu0 0.0
        %731 = vmatpush1.msra.mxu0 0.0
        %732 = vmatprep.subr.mxu0 0.0
        %733 = vmatpush1.msra.mxu0 0.0
        %734 = vmatprep.subr.mxu0 0.0
        %735 = vmatpush1.msra.mxu0 0.0
        %736 = vmatprep.subr.mxu0 0.0
        %737 = vmatpush1.msra.mxu0 0.0
        %738 = vmatprep.subr.mxu0 0.0
        %739 = vmatpush1.msra.mxu0 0.0
        %740 = vmatprep.subr.mxu0 0.0
        %741 = vmatpush1.msra.mxu0 0.0
        %742 = vmatprep.subr.mxu0 0.0
        %743 = vmatpush1.msra.mxu0 0.0
        %744 = vmatprep.subr.mxu0 0.0
        %745 = vmatpush1.msra.mxu0 0.0
        %746 = vmatprep.subr.mxu0 0.0
        %747 = vmatpush1.msra.mxu0 0.0
        %748 = vmatprep.subr.mxu0 0.0
        %749 = vmatpush1.msra.mxu0 0.0
        %750 = vmatprep.subr.mxu0 0.0
        %751 = vmatpush1.msra.mxu0 0.0
        %752 = vmatprep.subr.mxu0 0.0
        %753 = vmatpush1.msra.mxu0 0.0
        %754 = vmatprep.subr.mxu0 0.0
        %755 = vmatpush1.msra.mxu0 0.0
        %756 = vmatprep.subr.mxu0 0.0
        %757 = vmatpush1.msra.mxu0 0.0
        %758 = vmatprep.subr.mxu0 0.0
        %759 = vmatpush1.msra.mxu0 0.0
        %760 = vmatprep.subr.mxu0 0.0
        %761 = vmatpush1.msra.mxu0 0.0
        %762 = vmatprep.mubr.f32.mxu0 0.0
        %763 = vmatmul.mubr.f32.gmra.mrb[0].mxu0 %v675
        %v764 = vpop.f32.mrb[0].mxu0
        %v765 = vadd.f32 0.0, %v764
        %v766 = vpop.f32.mrb[0].mxu0
        %767 = vmatprep.mubr.f32.mxu0 0.0
        %768 = vmatmul.mubr.f32.gmra.mrb[0].mxu0 %v678
        %v769 = vpop.f32.mrb[0].mxu0
        %v770 = vadd.f32 0.0, %v769
        %v771 = vpop.f32.mrb[0].mxu0
        %772 = vmatprep.mubr.f32.mxu0 0.0
        %773 = vmatmul.mubr.f32.gmra.mrb[0].mxu0 %v681
        %v774 = vpop.f32.mrb[0].mxu0
        %v775 = vadd.f32 0.0, %v774
        %v776 = vpop.f32.mrb[0].mxu0
        %777 = vmatprep.mubr.f32.mxu0 0.0
        %778 = vmatmul.mubr.f32.gmra.mrb[0].mxu0 %v684
        %v779 = vpop.f32.mrb[0].mxu0
        %v780 = vadd.f32 0.0, %v779
        %v781 = vpop.f32.mrb[0].mxu0
        %782 = vmatprep.mubr.f32.mxu0 0.0
        %783 = vmatmul.mubr.f32.gmra.mrb[0].mxu0 %v687
        %v784 = vpop.f32.mrb[0].mxu0
        %v785 = vadd.f32 0.0, %v784
        %v786 = vpop.f32.mrb[0].mxu0
        %787 = vmatprep.mubr.f32.mxu0 0.0
        %788 = vmatmul.mubr.f32.gmra.mrb[0].mxu0 %v690
        %v789 = vpop.f32.mrb[0].mxu0
        %v790 = vadd.f32 0.0, %v789
        %v791 = vpop.f32.mrb[0].mxu0
        %792 = vmatprep.mubr.f32.mxu0 0.0
        %793 = vmatmul.mubr.f32.gmra.mrb[0].mxu0 %v693
        %v794 = vpop.f32.mrb[0].mxu0
        %v795 = vadd.f32 0.0, %v794
        %v796 = vpop.f32.mrb[0].mxu0
        %797 = vmatprep.mubr.f32.mxu0 0.0
        %798 = vmatmul.mubr.f32.gmra.mrb[0].mxu0 %v696
        %v799 = vpop.f32.mrb[0].mxu0
        %v800 = vadd.f32 0.0, %v799
        %v801 = vpop.f32.mrb[0].mxu0
        %802 = vdwg.mxu0
        %v804 = vsel %vm405, %v497, 0
        %v807 = vsel %vm405, %v502, 0
        %v810 = vsel %vm405, %v507, 0
        %v813 = vsel %vm405, %v512, 0
        %v816 = vsel %vm405, %v517, 0
        %v819 = vsel %vm405, %v522, 0
        %v822 = vsel %vm405, %v527, 0
        %v825 = vsel %vm405, %v532, 0
        %827 = vmatprep.subr.mxu0 0.0
        %828 = vmatpush1.msra.mxu0 %v665
        %829 = vmatprep.subr.mxu0 0.0
        %830 = vmatpush1.msra.mxu0 %v666
        %831 = vmatprep.subr.mxu0 0.0
        %832 = vmatpush1.msra.mxu0 %v667
        %833 = vmatprep.subr.mxu0 0.0
        %834 = vmatpush1.msra.mxu0 %v668
        %835 = vmatprep.subr.mxu0 0.0
        %836 = vmatpush1.msra.mxu0 0.0
        %837 = vmatprep.subr.mxu0 0.0
        %838 = vmatpush1.msra.mxu0 0.0
        %839 = vmatprep.subr.mxu0 0.0
        %840 = vmatpush1.msra.mxu0 0.0
        %841 = vmatprep.subr.mxu0 0.0
        %842 = vmatpush1.msra.mxu0 0.0
        %843 = vmatprep.subr.mxu0 0.0
        %844 = vmatpush1.msra.mxu0 0.0
        %845 = vmatprep.subr.mxu0 0.0
        %846 = vmatpush1.msra.mxu0 0.0
        %847 = vmatprep.subr.mxu0 0.0
        %848 = vmatpush1.msra.mxu0 0.0
        %849 = vmatprep.subr.mxu0 0.0
        %850 = vmatpush1.msra.mxu0 0.0
        %851 = vmatprep.subr.mxu0 0.0
        %852 = vmatpush1.msra.mxu0 0.0
        %853 = vmatprep.subr.mxu0 0.0
        %854 = vmatpush1.msra.mxu0 0.0
        %855 = vmatprep.subr.mxu0 0.0
        %856 = vmatpush1.msra.mxu0 0.0
        %857 = vmatprep.subr.mxu0 0.0
        %858 = vmatpush1.msra.mxu0 0.0
        %859 = vmatprep.subr.mxu0 0.0
        %860 = vmatpush1.msra.mxu0 0.0
        %861 = vmatprep.subr.mxu0 0.0
        %862 = vmatpush1.msra.mxu0 0.0
        %863 = vmatprep.subr.mxu0 0.0
        %864 = vmatpush1.msra.mxu0 0.0
        %865 = vmatprep.subr.mxu0 0.0
        %866 = vmatpush1.msra.mxu0 0.0
        %867 = vmatprep.subr.mxu0 0.0
        %868 = vmatpush1.msra.mxu0 0.0
        %869 = vmatprep.subr.mxu0 0.0
        %870 = vmatpush1.msra.mxu0 0.0
        %871 = vmatprep.subr.mxu0 0.0
        %872 = vmatpush1.msra.mxu0 0.0
        %873 = vmatprep.subr.mxu0 0.0
        %874 = vmatpush1.msra.mxu0 0.0
        %875 = vmatprep.subr.mxu0 0.0
        %876 = vmatpush1.msra.mxu0 0.0
        %877 = vmatprep.subr.mxu0 0.0
        %878 = vmatpush1.msra.mxu0 0.0
        %879 = vmatprep.subr.mxu0 0.0
        %880 = vmatpush1.msra.mxu0 0.0
        %881 = vmatprep.subr.mxu0 0.0
        %882 = vmatpush1.msra.mxu0 0.0
        %883 = vmatprep.subr.mxu0 0.0
        %884 = vmatpush1.msra.mxu0 0.0
        %885 = vmatprep.subr.mxu0 0.0
        %886 = vmatpush1.msra.mxu0 0.0
        %887 = vmatprep.subr.mxu0 0.0
        %888 = vmatpush1.msra.mxu0 0.0
        %889 = vmatprep.subr.mxu0 0.0
        %890 = vmatpush1.msra.mxu0 0.0
        %891 = vmatprep.mubr.f32.mxu0 0.0
        %892 = vmatmul.mubr.f32.gmra.mrb[0].mxu0 %v804
        %v893 = vpop.f32.mrb[0].mxu0
        %v894 = vadd.f32 %v765, %v893
        %v895 = vpop.f32.mrb[0].mxu0
        %896 = vmatprep.mubr.f32.mxu0 0.0
        %897 = vmatmul.mubr.f32.gmra.mrb[0].mxu0 %v807
        %v898 = vpop.f32.mrb[0].mxu0
        %v899 = vadd.f32 %v770, %v898
        %v900 = vpop.f32.mrb[0].mxu0
        %901 = vmatprep.mubr.f32.mxu0 0.0
        %902 = vmatmul.mubr.f32.gmra.mrb[0].mxu0 %v810
        %v903 = vpop.f32.mrb[0].mxu0
        %v904 = vadd.f32 %v775, %v903
        %v905 = vpop.f32.mrb[0].mxu0
        %906 = vmatprep.mubr.f32.mxu0 0.0
        %907 = vmatmul.mubr.f32.gmra.mrb[0].mxu0 %v813
        %v908 = vpop.f32.mrb[0].mxu0
        %v909 = vadd.f32 %v780, %v908
        %v910 = vpop.f32.mrb[0].mxu0
        %911 = vmatprep.mubr.f32.mxu0 0.0
        %912 = vmatmul.mubr.f32.gmra.mrb[0].mxu0 %v816
        %v913 = vpop.f32.mrb[0].mxu0
        %v914 = vadd.f32 %v785, %v913
        %v915 = vpop.f32.mrb[0].mxu0
        %916 = vmatprep.mubr.f32.mxu0 0.0
        %917 = vmatmul.mubr.f32.gmra.mrb[0].mxu0 %v819
        %v918 = vpop.f32.mrb[0].mxu0
        %v919 = vadd.f32 %v790, %v918
        %v920 = vpop.f32.mrb[0].mxu0
        %921 = vmatprep.mubr.f32.mxu0 0.0
        %922 = vmatmul.mubr.f32.gmra.mrb[0].mxu0 %v822
        %v923 = vpop.f32.mrb[0].mxu0
        %v924 = vadd.f32 %v795, %v923
        %v925 = vpop.f32.mrb[0].mxu0
        %926 = vmatprep.mubr.f32.mxu0 0.0
        %927 = vmatmul.mubr.f32.gmra.mrb[0].mxu0 %v825
        %v928 = vpop.f32.mrb[0].mxu0
        %v929 = vadd.f32 %v800, %v928
        %v930 = vpop.f32.mrb[0].mxu0
        %931 = vdwg.mxu0
        %v932 = vlaneseq
        %v933 = vshrl.u32 %v932, 7
        %v934 = vsub.s32 1, %v933
        %v935 = vrot.slane %v388, %v934
        %v936 = vadd.f32 %v894, %v935
        %v937 = vadd.f32 %v899, %v935
        %v938 = vadd.f32 %v904, %v935
        %v939 = vadd.f32 %v909, %v935
        %v940 = vadd.f32 %v914, %v935
        %v941 = vadd.f32 %v919, %v935
        %v942 = vadd.f32 %v924, %v935
        %v943 = vadd.f32 %v929, %v935
        %v944 = vmul.f32 %v936, %v936
        %v945 = vmul.f32 %v937, %v937
        %v946 = vmul.f32 %v938, %v938
        %v947 = vmul.f32 %v939, %v939
        %v948 = vmul.f32 %v940, %v940
        %v949 = vmul.f32 %v941, %v941
        %v950 = vmul.f32 %v942, %v942
        %v951 = vmul.f32 %v943, %v943
        %v952 = vsel %vm405, %v944, 0.0
        %953 = vadd.xlane.f32.xlu0 %v952
        %v954 = vpop.xlane.xlu0 %953
        %v955 = vsel %vm405, %v945, 0.0
        %956 = vadd.xlane.f32.xlu0 %v955
        %v957 = vpop.xlane.xlu0 %956
        %v958 = vsel %vm405, %v946, 0.0
        %959 = vadd.xlane.f32.xlu0 %v958
        %v960 = vpop.xlane.xlu0 %959
        %v961 = vsel %vm405, %v947, 0.0
        %962 = vadd.xlane.f32.xlu0 %v961
        %v963 = vpop.xlane.xlu0 %962
        %v964 = vsel %vm405, %v948, 0.0
        %965 = vadd.xlane.f32.xlu0 %v964
        %v966 = vpop.xlane.xlu0 %965
        %v967 = vsel %vm405, %v949, 0.0
        %968 = vadd.xlane.f32.xlu0 %v967
        %v969 = vpop.xlane.xlu0 %968
        %v970 = vsel %vm405, %v950, 0.0
        %971 = vadd.xlane.f32.xlu0 %v970
        %v972 = vpop.xlane.xlu0 %971
        %v973 = vsel %vm405, %v951, 0.0
        %974 = vadd.xlane.f32.xlu0 %v973
        %v975 = vpop.xlane.xlu0 %974
        %v976 = vmax.f32 %v954, 1e-24
        %v977 = vmax.f32 %v957, 1e-24
        %v978 = vmax.f32 %v960, 1e-24
        %v979 = vmax.f32 %v963, 1e-24
        %v980 = vmax.f32 %v966, 1e-24
        %v981 = vmax.f32 %v969, 1e-24
        %v982 = vmax.f32 %v972, 1e-24
        %v983 = vmax.f32 %v975, 1e-24
        %v984 = vrsqrt.pop %v976
        %v985 = vrsqrt.pop %v977
        %v986 = vrsqrt.pop %v978
        %v987 = vrsqrt.pop %v979
        %v988 = vrsqrt.pop %v980
        %v989 = vrsqrt.pop %v981
        %v990 = vrsqrt.pop %v982
        %v991 = vrsqrt.pop %v983
        %v992 = vmul.f32 %v936, %v984
        %v993 = vmul.f32 %v937, %v985
        %v994 = vmul.f32 %v938, %v986
        %v995 = vmul.f32 %v939, %v987
        %v996 = vmul.f32 %v940, %v988
        %v997 = vmul.f32 %v941, %v989
        %v998 = vmul.f32 %v942, %v990
        %v999 = vmul.f32 %v943, %v991
        %v1000 = vmax.f32 %v992, 0.0
        %v1001 = vmax.f32 %v993, 0.0
        %v1002 = vmax.f32 %v994, 0.0
        %v1003 = vmax.f32 %v995, 0.0
        %v1004 = vmax.f32 %v996, 0.0
        %v1005 = vmax.f32 %v997, 0.0
        %v1006 = vmax.f32 %v998, 0.0
        %v1007 = vmax.f32 %v999, 0.0
        %v1008 = vadd.f32 %v497, %v1000
        %v1009 = vadd.f32 %v502, %v1001
        %v1010 = vadd.f32 %v507, %v1002
        %v1011 = vadd.f32 %v512, %v1003
        %v1012 = vadd.f32 %v517, %v1004
        %v1013 = vadd.f32 %v522, %v1005
        %v1014 = vadd.f32 %v527, %v1006
        %v1015 = vadd.f32 %v532, %v1007
        %1016 = vmatprep.subr.mxu0 0.0
        %1017 = vmatpush1.msra.mxu0 %v1008
        %1018 = vmatprep.subr.mxu0 0.0
        %1019 = vmatpush1.msra.mxu0 %v1009
        %1020 = vmatprep.subr.mxu0 0.0
        %1021 = vmatpush1.msra.mxu0 %v1010
        %1022 = vmatprep.subr.mxu0 0.0
        %1023 = vmatpush1.msra.mxu0 %v1011
        %1024 = vmatprep.subr.mxu0 0.0
        %1025 = vmatpush1.msra.mxu0 %v1012
        %1026 = vmatprep.subr.mxu0 0.0
        %1027 = vmatpush1.msra.mxu0 %v1013
        %1028 = vmatprep.subr.mxu0 0.0
        %1029 = vmatpush1.msra.mxu0 %v1014
        %1030 = vmatprep.subr.mxu0 0.0
        %1031 = vmatpush1.msra.mxu0 %v1015
        %1032 = vmatprep.subr.mxu0 0.0
        %1033 = vmatpush1.msra.mxu0 0.0
        %1034 = vmatprep.subr.mxu0 0.0
        %1035 = vmatpush1.msra.mxu0 0.0
        %1036 = vmatprep.subr.mxu0 0.0
        %1037 = vmatpush1.msra.mxu0 0.0
        %1038 = vmatprep.subr.mxu0 0.0
        %1039 = vmatpush1.msra.mxu0 0.0
        %1040 = vmatprep.subr.mxu0 0.0
        %1041 = vmatpush1.msra.mxu0 0.0
        %1042 = vmatprep.subr.mxu0 0.0
        %1043 = vmatpush1.msra.mxu0 0.0
        %1044 = vmatprep.subr.mxu0 0.0
        %1045 = vmatpush1.msra.mxu0 0.0
        %1046 = vmatprep.subr.mxu0 0.0
        %1047 = vmatpush1.msra.mxu0 0.0
        %1048 = vmatprep.subr.mxu0 0.0
        %1049 = vmatpush1.msra.mxu0 0.0
        %1050 = vmatprep.subr.mxu0 0.0
        %1051 = vmatpush1.msra.mxu0 0.0
        %1052 = vmatprep.subr.mxu0 0.0
        %1053 = vmatpush1.msra.mxu0 0.0
        %1054 = vmatprep.subr.mxu0 0.0
        %1055 = vmatpush1.msra.mxu0 0.0
        %1056 = vmatprep.subr.mxu0 0.0
        %1057 = vmatpush1.msra.mxu0 0.0
        %1058 = vmatprep.subr.mxu0 0.0
        %1059 = vmatpush1.msra.mxu0 0.0
        %1060 = vmatprep.subr.mxu0 0.0
        %1061 = vmatpush1.msra.mxu0 0.0
        %1062 = vmatprep.subr.mxu0 0.0
        %1063 = vmatpush1.msra.mxu0 0.0
        %1064 = vmatprep.subr.mxu0 0.0
        %1065 = vmatpush1.msra.mxu0 0.0
        %1066 = vmatprep.subr.mxu0 0.0
        %1067 = vmatpush1.msra.mxu0 0.0
        %1068 = vmatprep.subr.mxu0 0.0
        %1069 = vmatpush1.msra.mxu0 0.0
        %1070 = vmatprep.subr.mxu0 0.0
        %1071 = vmatpush1.msra.mxu0 0.0
        %1072 = vmatprep.subr.mxu0 0.0
        %1073 = vmatpush1.msra.mxu0 0.0
        %1074 = vmatprep.subr.mxu0 0.0
        %1075 = vmatpush1.msra.mxu0 0.0
        %1076 = vmatprep.subr.mxu0 0.0
        %1077 = vmatpush1.msra.mxu0 0.0
        %1078 = vmatprep.subr.mxu0 0.0
        %1079 = vmatpush1.msra.mxu0 0.0
        %1080 = vmatprep.mubr.f32.mxu0 0.0
        %1081 = vmatmul.mubr.f32.gmra.mrb[0].mxu0 %v536
        %v1082 = vpop.f32.mrb[0].mxu0
        %v1083 = vadd.f32 0.0, %v1082
        %v1084 = vpop.f32.mrb[0].mxu0
        %1085 = vmatprep.mubr.f32.mxu0 0.0
        %1086 = vmatmul.mubr.f32.gmra.mrb[0].mxu0 %v539
        %v1087 = vpop.f32.mrb[0].mxu0
        %v1088 = vadd.f32 0.0, %v1087
        %v1089 = vpop.f32.mrb[0].mxu0
        %1090 = vmatprep.mubr.f32.mxu0 0.0
        %1091 = vmatmul.mubr.f32.gmra.mrb[0].mxu0 %v542
        %v1092 = vpop.f32.mrb[0].mxu0
        %v1093 = vadd.f32 0.0, %v1092
        %v1094 = vpop.f32.mrb[0].mxu0
        %1095 = vmatprep.mubr.f32.mxu0 0.0
        %1096 = vmatmul.mubr.f32.gmra.mrb[0].mxu0 %v545
        %v1097 = vpop.f32.mrb[0].mxu0
        %v1098 = vadd.f32 0.0, %v1097
        %v1099 = vpop.f32.mrb[0].mxu0
        %1100 = vmatprep.mubr.f32.mxu0 0.0
        %1101 = vmatmul.mubr.f32.gmra.mrb[0].mxu0 %v548
        %v1102 = vpop.f32.mrb[0].mxu0
        %v1103 = vadd.f32 0.0, %v1102
        %v1104 = vpop.f32.mrb[0].mxu0
        %1105 = vmatprep.mubr.f32.mxu0 0.0
        %1106 = vmatmul.mubr.f32.gmra.mrb[0].mxu0 %v551
        %v1107 = vpop.f32.mrb[0].mxu0
        %v1108 = vadd.f32 0.0, %v1107
        %v1109 = vpop.f32.mrb[0].mxu0
        %1110 = vmatprep.mubr.f32.mxu0 0.0
        %1111 = vmatmul.mubr.f32.gmra.mrb[0].mxu0 %v554
        %v1112 = vpop.f32.mrb[0].mxu0
        %v1113 = vadd.f32 0.0, %v1112
        %v1114 = vpop.f32.mrb[0].mxu0
        %1115 = vmatprep.mubr.f32.mxu0 0.0
        %1116 = vmatmul.mubr.f32.gmra.mrb[0].mxu0 %v557
        %v1117 = vpop.f32.mrb[0].mxu0
        %v1118 = vadd.f32 0.0, %v1117
        %v1119 = vpop.f32.mrb[0].mxu0
        %1120 = vdwg.mxu0
        %s1121 = scalar_lea.vmem %s3, 96
        %v1122 = vld [vmem:[%s1121] sm:$0xff]
        %v1123 = vld [vmem:[%s1121 + $0x8] sm:$0xff]
        %v1124 = vld [vmem:[%s1121 + $0x10] sm:$0xff]
        %v1125 = vld [vmem:[%s1121 + $0x18] sm:$0xff]
        %s1126 = scalar_lea.vmem %s3, 128
        %v1127 = vld [vmem:[%s1126] sm:$0xff]
        %v1128 = vld [vmem:[%s1126 + $0x8] sm:$0xff]
        %v1129 = vld [vmem:[%s1126 + $0x10] sm:$0xff]
        %v1130 = vld [vmem:[%s1126 + $0x18] sm:$0xff]
        %v1132 = vsel %vm405, %v1083, 0
        %v1135 = vsel %vm405, %v1088, 0
        %v1138 = vsel %vm405, %v1093, 0
        %v1141 = vsel %vm405, %v1098, 0
        %v1144 = vsel %vm405, %v1103, 0
        %v1147 = vsel %vm405, %v1108, 0
        %v1150 = vsel %vm405, %v1113, 0
        %v1153 = vsel %vm405, %v1118, 0
        %1155 = vmatprep.subr.mxu0 0.0
        %1156 = vmatpush1.msra.mxu0 %v1127
        %1157 = vmatprep.subr.mxu0 0.0
        %1158 = vmatpush1.msra.mxu0 %v1128
        %1159 = vmatprep.subr.mxu0 0.0
        %1160 = vmatpush1.msra.mxu0 %v1129
        %1161 = vmatprep.subr.mxu0 0.0
        %1162 = vmatpush1.msra.mxu0 %v1130
        %1163 = vmatprep.subr.mxu0 0.0
        %1164 = vmatpush1.msra.mxu0 0.0
        %1165 = vmatprep.subr.mxu0 0.0
        %1166 = vmatpush1.msra.mxu0 0.0
        %1167 = vmatprep.subr.mxu0 0.0
        %1168 = vmatpush1.msra.mxu0 0.0
        %1169 = vmatprep.subr.mxu0 0.0
        %1170 = vmatpush1.msra.mxu0 0.0
        %1171 = vmatprep.subr.mxu0 0.0
        %1172 = vmatpush1.msra.mxu0 0.0
        %1173 = vmatprep.subr.mxu0 0.0
        %1174 = vmatpush1.msra.mxu0 0.0
        %1175 = vmatprep.subr.mxu0 0.0
        %1176 = vmatpush1.msra.mxu0 0.0
        %1177 = vmatprep.subr.mxu0 0.0
        %1178 = vmatpush1.msra.mxu0 0.0
        %1179 = vmatprep.subr.mxu0 0.0
        %1180 = vmatpush1.msra.mxu0 0.0
        %1181 = vmatprep.subr.mxu0 0.0
        %1182 = vmatpush1.msra.mxu0 0.0
        %1183 = vmatprep.subr.mxu0 0.0
        %1184 = vmatpush1.msra.mxu0 0.0
        %1185 = vmatprep.subr.mxu0 0.0
        %1186 = vmatpush1.msra.mxu0 0.0
        %1187 = vmatprep.subr.mxu0 0.0
        %1188 = vmatpush1.msra.mxu0 0.0
        %1189 = vmatprep.subr.mxu0 0.0
        %1190 = vmatpush1.msra.mxu0 0.0
        %1191 = vmatprep.subr.mxu0 0.0
        %1192 = vmatpush1.msra.mxu0 0.0
        %1193 = vmatprep.subr.mxu0 0.0
        %1194 = vmatpush1.msra.mxu0 0.0
        %1195 = vmatprep.subr.mxu0 0.0
        %1196 = vmatpush1.msra.mxu0 0.0
        %1197 = vmatprep.subr.mxu0 0.0
        %1198 = vmatpush1.msra.mxu0 0.0
        %1199 = vmatprep.subr.mxu0 0.0
        %1200 = vmatpush1.msra.mxu0 0.0
        %1201 = vmatprep.subr.mxu0 0.0
        %1202 = vmatpush1.msra.mxu0 0.0
        %1203 = vmatprep.subr.mxu0 0.0
        %1204 = vmatpush1.msra.mxu0 0.0
        %1205 = vmatprep.subr.mxu0 0.0
        %1206 = vmatpush1.msra.mxu0 0.0
        %1207 = vmatprep.subr.mxu0 0.0
        %1208 = vmatpush1.msra.mxu0 0.0
        %1209 = vmatprep.subr.mxu0 0.0
        %1210 = vmatpush1.msra.mxu0 0.0
        %1211 = vmatprep.subr.mxu0 0.0
        %1212 = vmatpush1.msra.mxu0 0.0
        %1213 = vmatprep.subr.mxu0 0.0
        %1214 = vmatpush1.msra.mxu0 0.0
        %1215 = vmatprep.subr.mxu0 0.0
        %1216 = vmatpush1.msra.mxu0 0.0
        %1217 = vmatprep.subr.mxu0 0.0
        %1218 = vmatpush1.msra.mxu0 0.0
        %1219 = vmatprep.mubr.f32.mxu0 0.0
        %1220 = vmatmul.mubr.f32.gmra.mrb[0].mxu0 %v1132
        %v1221 = vpop.f32.mrb[0].mxu0
        %v1222 = vadd.f32 0.0, %v1221
        %v1223 = vpop.f32.mrb[0].mxu0
        %1224 = vmatprep.mubr.f32.mxu0 0.0
        %1225 = vmatmul.mubr.f32.gmra.mrb[0].mxu0 %v1135
        %v1226 = vpop.f32.mrb[0].mxu0
        %v1227 = vadd.f32 0.0, %v1226
        %v1228 = vpop.f32.mrb[0].mxu0
        %1229 = vmatprep.mubr.f32.mxu0 0.0
        %1230 = vmatmul.mubr.f32.gmra.mrb[0].mxu0 %v1138
        %v1231 = vpop.f32.mrb[0].mxu0
        %v1232 = vadd.f32 0.0, %v1231
        %v1233 = vpop.f32.mrb[0].mxu0
        %1234 = vmatprep.mubr.f32.mxu0 0.0
        %1235 = vmatmul.mubr.f32.gmra.mrb[0].mxu0 %v1141
        %v1236 = vpop.f32.mrb[0].mxu0
        %v1237 = vadd.f32 0.0, %v1236
        %v1238 = vpop.f32.mrb[0].mxu0
        %1239 = vmatprep.mubr.f32.mxu0 0.0
        %1240 = vmatmul.mubr.f32.gmra.mrb[0].mxu0 %v1144
        %v1241 = vpop.f32.mrb[0].mxu0
        %v1242 = vadd.f32 0.0, %v1241
        %v1243 = vpop.f32.mrb[0].mxu0
        %1244 = vmatprep.mubr.f32.mxu0 0.0
        %1245 = vmatmul.mubr.f32.gmra.mrb[0].mxu0 %v1147
        %v1246 = vpop.f32.mrb[0].mxu0
        %v1247 = vadd.f32 0.0, %v1246
        %v1248 = vpop.f32.mrb[0].mxu0
        %1249 = vmatprep.mubr.f32.mxu0 0.0
        %1250 = vmatmul.mubr.f32.gmra.mrb[0].mxu0 %v1150
        %v1251 = vpop.f32.mrb[0].mxu0
        %v1252 = vadd.f32 0.0, %v1251
        %v1253 = vpop.f32.mrb[0].mxu0
        %1254 = vmatprep.mubr.f32.mxu0 0.0
        %1255 = vmatmul.mubr.f32.gmra.mrb[0].mxu0 %v1153
        %v1256 = vpop.f32.mrb[0].mxu0
        %v1257 = vadd.f32 0.0, %v1256
        %v1258 = vpop.f32.mrb[0].mxu0
        %1259 = vdwg.mxu0
        %v1261 = vsel %vm405, %v1008, 0
        %v1264 = vsel %vm405, %v1009, 0
        %v1267 = vsel %vm405, %v1010, 0
        %v1270 = vsel %vm405, %v1011, 0
        %v1273 = vsel %vm405, %v1012, 0
        %v1276 = vsel %vm405, %v1013, 0
        %v1279 = vsel %vm405, %v1014, 0
        %v1282 = vsel %vm405, %v1015, 0
        %1284 = vmatprep.subr.mxu0 0.0
        %1285 = vmatpush1.msra.mxu0 %v1122
        %1286 = vmatprep.subr.mxu0 0.0
        %1287 = vmatpush1.msra.mxu0 %v1123
        %1288 = vmatprep.subr.mxu0 0.0
        %1289 = vmatpush1.msra.mxu0 %v1124
        %1290 = vmatprep.subr.mxu0 0.0
        %1291 = vmatpush1.msra.mxu0 %v1125
        %1292 = vmatprep.subr.mxu0 0.0
        %1293 = vmatpush1.msra.mxu0 0.0
        %1294 = vmatprep.subr.mxu0 0.0
        %1295 = vmatpush1.msra.mxu0 0.0
        %1296 = vmatprep.subr.mxu0 0.0
        %1297 = vmatpush1.msra.mxu0 0.0
        %1298 = vmatprep.subr.mxu0 0.0
        %1299 = vmatpush1.msra.mxu0 0.0
        %1300 = vmatprep.subr.mxu0 0.0
        %1301 = vmatpush1.msra.mxu0 0.0
        %1302 = vmatprep.subr.mxu0 0.0
        %1303 = vmatpush1.msra.mxu0 0.0
        %1304 = vmatprep.subr.mxu0 0.0
        %1305 = vmatpush1.msra.mxu0 0.0
        %1306 = vmatprep.subr.mxu0 0.0
        %1307 = vmatpush1.msra.mxu0 0.0
        %1308 = vmatprep.subr.mxu0 0.0
        %1309 = vmatpush1.msra.mxu0 0.0
        %1310 = vmatprep.subr.mxu0 0.0
        %1311 = vmatpush1.msra.mxu0 0.0
        %1312 = vmatprep.subr.mxu0 0.0
        %1313 = vmatpush1.msra.mxu0 0.0
        %1314 = vmatprep.subr.mxu0 0.0
        %1315 = vmatpush1.msra.mxu0 0.0
        %1316 = vmatprep.subr.mxu0 0.0
        %1317 = vmatpush1.msra.mxu0 0.0
        %1318 = vmatprep.subr.mxu0 0.0
        %1319 = vmatpush1.msra.mxu0 0.0
        %1320 = vmatprep.subr.mxu0 0.0
        %1321 = vmatpush1.msra.mxu0 0.0
        %1322 = vmatprep.subr.mxu0 0.0
        %1323 = vmatpush1.msra.mxu0 0.0
        %1324 = vmatprep.subr.mxu0 0.0
        %1325 = vmatpush1.msra.mxu0 0.0
        %1326 = vmatprep.subr.mxu0 0.0
        %1327 = vmatpush1.msra.mxu0 0.0
        %1328 = vmatprep.subr.mxu0 0.0
        %1329 = vmatpush1.msra.mxu0 0.0
        %1330 = vmatprep.subr.mxu0 0.0
        %1331 = vmatpush1.msra.mxu0 0.0
        %1332 = vmatprep.subr.mxu0 0.0
        %1333 = vmatpush1.msra.mxu0 0.0
        %1334 = vmatprep.subr.mxu0 0.0
        %1335 = vmatpush1.msra.mxu0 0.0
        %1336 = vmatprep.subr.mxu0 0.0
        %1337 = vmatpush1.msra.mxu0 0.0
        %1338 = vmatprep.subr.mxu0 0.0
        %1339 = vmatpush1.msra.mxu0 0.0
        %1340 = vmatprep.subr.mxu0 0.0
        %1341 = vmatpush1.msra.mxu0 0.0
        %1342 = vmatprep.subr.mxu0 0.0
        %1343 = vmatpush1.msra.mxu0 0.0
        %1344 = vmatprep.subr.mxu0 0.0
        %1345 = vmatpush1.msra.mxu0 0.0
        %1346 = vmatprep.subr.mxu0 0.0
        %1347 = vmatpush1.msra.mxu0 0.0
        %1348 = vmatprep.mubr.f32.mxu0 0.0
        %1349 = vmatmul.mubr.f32.gmra.mrb[0].mxu0 %v1261
        %v1350 = vpop.f32.mrb[0].mxu0
        %v1351 = vadd.f32 %v1222, %v1350
        %v1352 = vpop.f32.mrb[0].mxu0
        %1353 = vmatprep.mubr.f32.mxu0 0.0
        %1354 = vmatmul.mubr.f32.gmra.mrb[0].mxu0 %v1264
        %v1355 = vpop.f32.mrb[0].mxu0
        %v1356 = vadd.f32 %v1227, %v1355
        %v1357 = vpop.f32.mrb[0].mxu0
        %1358 = vmatprep.mubr.f32.mxu0 0.0
        %1359 = vmatmul.mubr.f32.gmra.mrb[0].mxu0 %v1267
        %v1360 = vpop.f32.mrb[0].mxu0
        %v1361 = vadd.f32 %v1232, %v1360
        %v1362 = vpop.f32.mrb[0].mxu0
        %1363 = vmatprep.mubr.f32.mxu0 0.0
        %1364 = vmatmul.mubr.f32.gmra.mrb[0].mxu0 %v1270
        %v1365 = vpop.f32.mrb[0].mxu0
        %v1366 = vadd.f32 %v1237, %v1365
        %v1367 = vpop.f32.mrb[0].mxu0
        %1368 = vmatprep.mubr.f32.mxu0 0.0
        %1369 = vmatmul.mubr.f32.gmra.mrb[0].mxu0 %v1273
        %v1370 = vpop.f32.mrb[0].mxu0
        %v1371 = vadd.f32 %v1242, %v1370
        %v1372 = vpop.f32.mrb[0].mxu0
        %1373 = vmatprep.mubr.f32.mxu0 0.0
        %1374 = vmatmul.mubr.f32.gmra.mrb[0].mxu0 %v1276
        %v1375 = vpop.f32.mrb[0].mxu0
        %v1376 = vadd.f32 %v1247, %v1375
        %v1377 = vpop.f32.mrb[0].mxu0
        %1378 = vmatprep.mubr.f32.mxu0 0.0
        %1379 = vmatmul.mubr.f32.gmra.mrb[0].mxu0 %v1279
        %v1380 = vpop.f32.mrb[0].mxu0
        %v1381 = vadd.f32 %v1252, %v1380
        %v1382 = vpop.f32.mrb[0].mxu0
        %1383 = vmatprep.mubr.f32.mxu0 0.0
        %1384 = vmatmul.mubr.f32.gmra.mrb[0].mxu0 %v1282
        %v1385 = vpop.f32.mrb[0].mxu0
        %v1386 = vadd.f32 %v1257, %v1385
        %v1387 = vpop.f32.mrb[0].mxu0
        %1388 = vdwg.mxu0
        %v1389 = vlaneseq
        %v1390 = vshrl.u32 %v1389, 7
        %v1391 = vsub.s32 2, %v1390
        %v1392 = vrot.slane %v388, %v1391
        %v1393 = vadd.f32 %v1351, %v1392
        %v1394 = vadd.f32 %v1356, %v1392
        %v1395 = vadd.f32 %v1361, %v1392
        %v1396 = vadd.f32 %v1366, %v1392
        %v1397 = vadd.f32 %v1371, %v1392
        %v1398 = vadd.f32 %v1376, %v1392
        %v1399 = vadd.f32 %v1381, %v1392
        %v1400 = vadd.f32 %v1386, %v1392
        %v1401 = vmul.f32 %v1393, %v1393
        %v1402 = vmul.f32 %v1394, %v1394
        %v1403 = vmul.f32 %v1395, %v1395
        %v1404 = vmul.f32 %v1396, %v1396
        %v1405 = vmul.f32 %v1397, %v1397
        %v1406 = vmul.f32 %v1398, %v1398
        %v1407 = vmul.f32 %v1399, %v1399
        %v1408 = vmul.f32 %v1400, %v1400
        %v1409 = vsel %vm405, %v1401, 0.0
        %1410 = vadd.xlane.f32.xlu0 %v1409
        %v1411 = vpop.xlane.xlu0 %1410
        %v1412 = vsel %vm405, %v1402, 0.0
        %1413 = vadd.xlane.f32.xlu0 %v1412
        %v1414 = vpop.xlane.xlu0 %1413
        %v1415 = vsel %vm405, %v1403, 0.0
        %1416 = vadd.xlane.f32.xlu0 %v1415
        %v1417 = vpop.xlane.xlu0 %1416
        %v1418 = vsel %vm405, %v1404, 0.0
        %1419 = vadd.xlane.f32.xlu0 %v1418
        %v1420 = vpop.xlane.xlu0 %1419
        %v1421 = vsel %vm405, %v1405, 0.0
        %1422 = vadd.xlane.f32.xlu0 %v1421
        %v1423 = vpop.xlane.xlu0 %1422
        %v1424 = vsel %vm405, %v1406, 0.0
        %1425 = vadd.xlane.f32.xlu0 %v1424
        %v1426 = vpop.xlane.xlu0 %1425
        %v1427 = vsel %vm405, %v1407, 0.0
        %1428 = vadd.xlane.f32.xlu0 %v1427
        %v1429 = vpop.xlane.xlu0 %1428
        %v1430 = vsel %vm405, %v1408, 0.0
        %1431 = vadd.xlane.f32.xlu0 %v1430
        %v1432 = vpop.xlane.xlu0 %1431
        %v1433 = vmax.f32 %v1411, 1e-24
        %v1434 = vmax.f32 %v1414, 1e-24
        %v1435 = vmax.f32 %v1417, 1e-24
        %v1436 = vmax.f32 %v1420, 1e-24
        %v1437 = vmax.f32 %v1423, 1e-24
        %v1438 = vmax.f32 %v1426, 1e-24
        %v1439 = vmax.f32 %v1429, 1e-24
        %v1440 = vmax.f32 %v1432, 1e-24
        %v1441 = vrsqrt.pop %v1433
        %v1442 = vrsqrt.pop %v1434
        %v1443 = vrsqrt.pop %v1435
        %v1444 = vrsqrt.pop %v1436
        %v1445 = vrsqrt.pop %v1437
        %v1446 = vrsqrt.pop %v1438
        %v1447 = vrsqrt.pop %v1439
        %v1448 = vrsqrt.pop %v1440
        %v1449 = vmul.f32 %v1393, %v1441
        %v1450 = vmul.f32 %v1394, %v1442
        %v1451 = vmul.f32 %v1395, %v1443
        %v1452 = vmul.f32 %v1396, %v1444
        %v1453 = vmul.f32 %v1397, %v1445
        %v1454 = vmul.f32 %v1398, %v1446
        %v1455 = vmul.f32 %v1399, %v1447
        %v1456 = vmul.f32 %v1400, %v1448
        %v1457 = vmax.f32 %v1449, 0.0
        %v1458 = vmax.f32 %v1450, 0.0
        %v1459 = vmax.f32 %v1451, 0.0
        %v1460 = vmax.f32 %v1452, 0.0
        %v1461 = vmax.f32 %v1453, 0.0
        %v1462 = vmax.f32 %v1454, 0.0
        %v1463 = vmax.f32 %v1455, 0.0
        %v1464 = vmax.f32 %v1456, 0.0
        %v1465 = vadd.f32 %v1008, %v1457
        %v1466 = vadd.f32 %v1009, %v1458
        %v1467 = vadd.f32 %v1010, %v1459
        %v1468 = vadd.f32 %v1011, %v1460
        %v1469 = vadd.f32 %v1012, %v1461
        %v1470 = vadd.f32 %v1013, %v1462
        %v1471 = vadd.f32 %v1014, %v1463
        %v1472 = vadd.f32 %v1015, %v1464
        %v1474 = vsel %vm308, %v387, 0
        %1476 = vmatprep.subr.mxu0 0.0
        %1477 = vmatpush1.msra.mxu0 %v1465
        %1478 = vmatprep.subr.mxu0 0.0
        %1479 = vmatpush1.msra.mxu0 %v1466
        %1480 = vmatprep.subr.mxu0 0.0
        %1481 = vmatpush1.msra.mxu0 %v1467
        %1482 = vmatprep.subr.mxu0 0.0
        %1483 = vmatpush1.msra.mxu0 %v1468
        %1484 = vmatprep.subr.mxu0 0.0
        %1485 = vmatpush1.msra.mxu0 %v1469
        %1486 = vmatprep.subr.mxu0 0.0
        %1487 = vmatpush1.msra.mxu0 %v1470
        %1488 = vmatprep.subr.mxu0 0.0
        %1489 = vmatpush1.msra.mxu0 %v1471
        %1490 = vmatprep.subr.mxu0 0.0
        %1491 = vmatpush1.msra.mxu0 %v1472
        %1492 = vmatprep.subr.mxu0 0.0
        %1493 = vmatpush1.msra.mxu0 0.0
        %1494 = vmatprep.subr.mxu0 0.0
        %1495 = vmatpush1.msra.mxu0 0.0
        %1496 = vmatprep.subr.mxu0 0.0
        %1497 = vmatpush1.msra.mxu0 0.0
        %1498 = vmatprep.subr.mxu0 0.0
        %1499 = vmatpush1.msra.mxu0 0.0
        %1500 = vmatprep.subr.mxu0 0.0
        %1501 = vmatpush1.msra.mxu0 0.0
        %1502 = vmatprep.subr.mxu0 0.0
        %1503 = vmatpush1.msra.mxu0 0.0
        %1504 = vmatprep.subr.mxu0 0.0
        %1505 = vmatpush1.msra.mxu0 0.0
        %1506 = vmatprep.subr.mxu0 0.0
        %1507 = vmatpush1.msra.mxu0 0.0
        %1508 = vmatprep.subr.mxu0 0.0
        %1509 = vmatpush1.msra.mxu0 0.0
        %1510 = vmatprep.subr.mxu0 0.0
        %1511 = vmatpush1.msra.mxu0 0.0
        %1512 = vmatprep.subr.mxu0 0.0
        %1513 = vmatpush1.msra.mxu0 0.0
        %1514 = vmatprep.subr.mxu0 0.0
        %1515 = vmatpush1.msra.mxu0 0.0
        %1516 = vmatprep.subr.mxu0 0.0
        %1517 = vmatpush1.msra.mxu0 0.0
        %1518 = vmatprep.subr.mxu0 0.0
        %1519 = vmatpush1.msra.mxu0 0.0
        %1520 = vmatprep.subr.mxu0 0.0
        %1521 = vmatpush1.msra.mxu0 0.0
        %1522 = vmatprep.subr.mxu0 0.0
        %1523 = vmatpush1.msra.mxu0 0.0
        %1524 = vmatprep.subr.mxu0 0.0
        %1525 = vmatpush1.msra.mxu0 0.0
        %1526 = vmatprep.subr.mxu0 0.0
        %1527 = vmatpush1.msra.mxu0 0.0
        %1528 = vmatprep.subr.mxu0 0.0
        %1529 = vmatpush1.msra.mxu0 0.0
        %1530 = vmatprep.subr.mxu0 0.0
        %1531 = vmatpush1.msra.mxu0 0.0
        %1532 = vmatprep.subr.mxu0 0.0
        %1533 = vmatpush1.msra.mxu0 0.0
        %1534 = vmatprep.subr.mxu0 0.0
        %1535 = vmatpush1.msra.mxu0 0.0
        %1536 = vmatprep.subr.mxu0 0.0
        %1537 = vmatpush1.msra.mxu0 0.0
        %1538 = vmatprep.subr.mxu0 0.0
        %1539 = vmatpush1.msra.mxu0 0.0
        %1540 = vmatprep.mubr.f32.mxu0 0.0
        %1541 = vmatmul.mubr.f32.gmra.mrb[0].mxu0 %v1474
        %v1542 = vpop.f32.mrb[0].mxu0
        %v1543 = vadd.f32 0.0, %v1542
        %v1544 = vpop.f32.mrb[0].mxu0
        %1545 = vdwg.mxu0
        %v1546 = vmul.f32 %v1543, %v1543
        %v1547 = vsel %vm405, %v1546, 0.0
        %1548 = vadd.xlane.f32.xlu0 %v1547
        %v1549 = vpop.xlane.xlu0 %1548
        %s1550 = scalar_lea.vmem %s3, 160
        %v1551 = vld [vmem:[%s1550] sm:$0xff]
        %v1552 = vld [vmem:[%s1550 + $0x8] sm:$0xff]
        %v1553 = vld [vmem:[%s1550 + $0x10] sm:$0xff]
        %v1554 = vld [vmem:[%s1550 + $0x18] sm:$0xff]
        %v1556 = vsel %vm405, %v1543, 0
        %1558 = vmatprep.subr.mxu0 0.0
        %1559 = vmatpush1.msra.mxu0 %v1551
        %1560 = vmatprep.subr.mxu0 0.0
        %1561 = vmatpush1.msra.mxu0 %v1552
        %1562 = vmatprep.subr.mxu0 0.0
        %1563 = vmatpush1.msra.mxu0 %v1553
        %1564 = vmatprep.subr.mxu0 0.0
        %1565 = vmatpush1.msra.mxu0 %v1554
        %1566 = vmatprep.subr.mxu0 0.0
        %1567 = vmatpush1.msra.mxu0 0.0
        %1568 = vmatprep.subr.mxu0 0.0
        %1569 = vmatpush1.msra.mxu0 0.0
        %1570 = vmatprep.subr.mxu0 0.0
        %1571 = vmatpush1.msra.mxu0 0.0
        %1572 = vmatprep.subr.mxu0 0.0
        %1573 = vmatpush1.msra.mxu0 0.0
        %1574 = vmatprep.subr.mxu0 0.0
        %1575 = vmatpush1.msra.mxu0 0.0
        %1576 = vmatprep.subr.mxu0 0.0
        %1577 = vmatpush1.msra.mxu0 0.0
        %1578 = vmatprep.subr.mxu0 0.0
        %1579 = vmatpush1.msra.mxu0 0.0
        %1580 = vmatprep.subr.mxu0 0.0
        %1581 = vmatpush1.msra.mxu0 0.0
        %1582 = vmatprep.subr.mxu0 0.0
        %1583 = vmatpush1.msra.mxu0 0.0
        %1584 = vmatprep.subr.mxu0 0.0
        %1585 = vmatpush1.msra.mxu0 0.0
        %1586 = vmatprep.subr.mxu0 0.0
        %1587 = vmatpush1.msra.mxu0 0.0
        %1588 = vmatprep.subr.mxu0 0.0
        %1589 = vmatpush1.msra.mxu0 0.0
        %1590 = vmatprep.subr.mxu0 0.0
        %1591 = vmatpush1.msra.mxu0 0.0
        %1592 = vmatprep.subr.mxu0 0.0
        %1593 = vmatpush1.msra.mxu0 0.0
        %1594 = vmatprep.subr.mxu0 0.0
        %1595 = vmatpush1.msra.mxu0 0.0
        %1596 = vmatprep.subr.mxu0 0.0
        %1597 = vmatpush1.msra.mxu0 0.0
        %1598 = vmatprep.subr.mxu0 0.0
        %1599 = vmatpush1.msra.mxu0 0.0
        %1600 = vmatprep.subr.mxu0 0.0
        %1601 = vmatpush1.msra.mxu0 0.0
        %1602 = vmatprep.subr.mxu0 0.0
        %1603 = vmatpush1.msra.mxu0 0.0
        %1604 = vmatprep.subr.mxu0 0.0
        %1605 = vmatpush1.msra.mxu0 0.0
        %1606 = vmatprep.subr.mxu0 0.0
        %1607 = vmatpush1.msra.mxu0 0.0
        %1608 = vmatprep.subr.mxu0 0.0
        %1609 = vmatpush1.msra.mxu0 0.0
        %1610 = vmatprep.subr.mxu0 0.0
        %1611 = vmatpush1.msra.mxu0 0.0
        %1612 = vmatprep.subr.mxu0 0.0
        %1613 = vmatpush1.msra.mxu0 0.0
        %1614 = vmatprep.subr.mxu0 0.0
        %1615 = vmatpush1.msra.mxu0 0.0
        %1616 = vmatprep.subr.mxu0 0.0
        %1617 = vmatpush1.msra.mxu0 0.0
        %1618 = vmatprep.subr.mxu0 0.0
        %1619 = vmatpush1.msra.mxu0 0.0
        %1620 = vmatprep.subr.mxu0 0.0
        %1621 = vmatpush1.msra.mxu0 0.0
        %1622 = vmatprep.mubr.f32.mxu0 0.0
        %1623 = vmatmul.mubr.f32.gmra.mrb[0].mxu0 %v1556
        %v1624 = vpop.f32.mrb[0].mxu0
        %v1625 = vadd.f32 0.0, %v1624
        %v1626 = vpop.f32.mrb[0].mxu0
        %1627 = vdwg.mxu0
        %v1628 = vlaneseq
        %v1629 = vshrl.u32 %v1628, 7
        %v1630 = vsub.s32 3, %v1629
        %v1631 = vrot.slane %v388, %v1630
        %v1632 = vadd.f32 %v1549, %v1631
        %v1633 = vmul.f32 %v1625, 2.0
        %v1634 = vsub.f32 %v1632, %v1633
        %v1635 = vmax.f32 %v1634, 0.0
        %v1636 = vadd.f32 %v1635, 1.0
        %v1637 = vadd.f32 %v1635, 1e-12
        %v1638 = vrcp.pop %v1637
        %v1639 = vmul.f32 %v1636, %v1638
        %v1640 = vlog2.pop %v1639
        %v1641 = vmul.f32 %v1640, 0.6931472
        %v1642 = vlaneseq
        %v1643 = vshrl.u32 %v1642, 7
        %v1644 = vsub.s32 4, %v1643
        %v1645 = vrot.slane %v388, %v1644
        %v1646 = vmul.f32 %v1641, %v1645
        %v1647 = vsel %vm405, %v1646, 0.0
        %1648 = vadd.xlane.f32.xlu0 %v1647
        %v1649 = vpop.xlane.xlu0 %1648
        %v1650 = vxor.u32 %v1649, 2147483648
        %v1651 = vmul.f32 %v1650, 1.442695
        %v1652 = vpow.pop %v1651
        %v1653 = vadd.f32 %v1652, 1.0
        %v1654 = vrcp.pop %v1653
        %v1655 = vmul.f32 1.0, %v1654
        %1656 = vst [vmem:[%s294] sm:$0xff] %v1655
        %s1657 = sand.u32 %s153, 1
        %s1658 = scalar_lea.sflag [#allocation4], %s1657
        %s1659 = sand.u32 %s153, 1
        %s1660 = smul.addr %s1659, 8
        %s1661 = scalar_lea.vmem [#allocation7], %s1660
        // Predicated region
        $region49: #{tpu_custom_call.1} parent=39 // pred_check
          %p1662 = pneg %p163
        $region50: #{tpu_custom_call.1} parent=39 // pred_check_branch
          %1664 = sbr.rel (%p1662) target = $region52
        $region51: #{tpu_custom_call.1} parent=39 // pred_region
          %s1666 = ssub.s32 128, 128
          %1667 = vsyncadd %s1658, %s1666
          %s1668 = smul.addr %s25, 128
          %s1669 = scalar_lea.hbm %s5, %s1668
          %s1671 = sshll.u32 %s1661, 4
          %s1672 = int_to_ptr.vmem [resolvable:$true] %s1671
          %1674 = dma.vmem_to_hbm [thread:$0]  %s1672, 128, %s1669, %s1658
        $region52: #{tpu_custom_call.1} parent=39 // pred_fallthru
          _
      $region40: #{tpu_custom_call.1} parent=5 // pred_fallthru
        _
      %p1675 = scmp.le.s32.totalorder 2, %s20
      // Predicated region
      $region53: #{tpu_custom_call.1} parent=5 // pred_check
        %p1676 = pneg %p1675
      $region54: #{tpu_custom_call.1} parent=5 // pred_check_branch
        %1678 = sbr.rel (%p1676) target = $region56
      $region55: #{tpu_custom_call.1} parent=5 // pred_region
        %s1679 = ssub.s32 %s20, 2
        // Predicated region
        $region57: #{tpu_custom_call.1} parent=55 // pred_check
          %p1680 = pneg %p169
        $region58: #{tpu_custom_call.1} parent=55 // pred_check_branch
          %1682 = sbr.rel (%p1680) target = $region60
        $region59: #{tpu_custom_call.1} parent=55 // pred_region
          %s1683 = sand.u32 %s154, 1
          %s1684 = scalar_lea.sflag [#allocation4], %s1683
          %s1685 = sand.u32 %s154, 1
          %s1686 = smul.addr %s1685, 8
          %s1687 = scalar_lea.vmem [#allocation7], %s1686
          %1688 = dma.done %s1684, 128
        $region60: #{tpu_custom_call.1} parent=55 // pred_fallthru
          _
      $region56: #{tpu_custom_call.1} parent=5 // pred_fallthru
        _
    $region6: #{tpu_custom_call.1} parent=1 // loop_footer
      %s24 = sadd.s32 1, %s20
    $region7: #{tpu_custom_call.1} parent=1 // loop_footer_branch
      %19 = sbr.rel target = $region3
    $region8: #{tpu_custom_call.1} parent=1 // loop_exit
      _
    %1689 = vsyncpa [#allocation3], 1
    %s1690 = scalar_lea.sflag [#allocation3], 1
    %1691 = vsyncpa %s1690, 1
    %1692 = vsyncpa [#allocation6], 1
    %s1693 = scalar_lea.sflag [#allocation6], 1
    %1694 = vsyncpa %s1693, 1
    %1695 = vsyncpa [#allocation4], 1
    %s1696 = scalar_lea.sflag [#allocation4], 1
    %1697 = vsyncpa %s1696, 1

</llo_original>
